<compile_context>
chip_gen: v7x
topology: tpu7x:2x2x1
jax: 0.10.0
libtpu: 0.0.40
codegen_flags: <defaults>
</compile_context>

<pallas_src>
import math

import jax
import jax.numpy as jnp
from jax import lax
from jax.experimental import pallas as pl
from jax.experimental.pallas import tpu as pltpu


# ----------------------------------------------------------------------------
# Helpers
# ----------------------------------------------------------------------------
def _same_padding(kernel_size):
    # Matches nn.ConstantPad1d in the reference Conv block:
    #   even k  -> (k//2 - 1, k//2),  odd k -> (k//2, k//2)
    if kernel_size % 2 == 0:
        return (kernel_size // 2 - 1, kernel_size // 2)
    return (kernel_size // 2, kernel_size // 2)


def _vmem_full_spec(shape):
    """Whole-array VMEM block for a grid=(1,) call."""
    rank = len(shape)
    return pl.BlockSpec(shape, lambda i, _r=rank: (0,) * _r)


# ----------------------------------------------------------------------------
# Fused Pallas kernel (entire forward pass)
# ----------------------------------------------------------------------------
def _build_fused_kernel(conv_cfg, n_batch, seq_len, pad_off):
    """conv_cfg: list of (k, pad_l, cin, cout); the last layer must have cout==1.

    Kernel ref layout:
      refs = [x, (w_i, b_i) for each conv, w_fc1, b_fc1, w_fc2, b_fc2,
              o_ref, xpad_scratch]
    """
    n_conv = len(conv_cfg)
    N, L = n_batch, seq_len

    def kernel(*refs):
        x_ref = refs[0]
        conv_w = [refs[1 + 2 * i] for i in range(n_conv)]
        conv_b = [refs[2 + 2 * i] for i in range(n_conv)]
        w1_ref, b1_ref, w2_ref, b2_ref = refs[1 + 2 * n_conv: 5 + 2 * n_conv]
        o_ref = refs[5 + 2 * n_conv]
        xpad_ref = refs[6 + 2 * n_conv]

        # Zero the padded slab once: only the interior [pad_off, pad_off+L) is
        # ever rewritten, so padding rows/channels stay zero for every layer.
        xpad_ref[...] = jnp.zeros_like(xpad_ref)

        act = x_ref[...].astype(jnp.float32)               # (N, L, C_in), NLC

        feat = None
        for li, (k, pad_l, cin, cout) in enumerate(conv_cfg):
            last = li == n_conv - 1
            # Stage this layer's input into the zero-padded VMEM slab
            # (sublane-aligned interior offset -> cheap aligned store).
            xpad_ref[:, pad_off:pad_off + L, 0:cin] = act

            w_ref = conv_w[li]
            b_ref = conv_b[li]

            if not last:
                # Hidden conv: batch folded into M, per-tap MXU dots + tanh.
                acc = jnp.broadcast_to(b_ref[...], (N * L, cout)).astype(jnp.float32)
                for j in range(k):                          # static, unrolled
                    r0 = pad_off - pad_l + j
                    tap = xpad_ref[:, r0:r0 + L, 0:cin]     # (N, L, cin)
                    acc = acc + jnp.dot(tap.reshape(N * L, cin), w_ref[j],
                                        preferred_element_type=jnp.float32)
                act = jnp.tanh(acc).reshape(N, L, cout)
            else:
                # Final conv (cout == 1): VPU broadcast-multiply + lane reduce
                # -> lane-dense (N, L) feature, no (N, L, 1) squeeze needed.
                z = jnp.broadcast_to(b_ref[...], (N, L)).astype(jnp.float32)
                for j in range(k):                          # static, unrolled
                    r0 = pad_off - pad_l + j
                    tap = xpad_ref[:, r0:r0 + L, 0:cin]     # (N, L, cin)
                    z = z + jnp.sum(tap * w_ref[j], axis=-1)  # w_ref[j]: (1, cin)
                feat = jnp.tanh(z)                           # (N, L)

        # FC head.  Flatten is implicit (final conv has 1 channel).
        # TODO(synk): Dropout is a no-op at inference; training-mode dropout
        # is not implemented.
        h = jnp.tanh(jnp.dot(feat, w1_ref[...],
                             preferred_element_type=jnp.float32) + b1_ref[...])
        y = jnp.dot(h, w2_ref[...],
                    preferred_element_type=jnp.float32) + b2_ref[...]
        o_ref[...] = y.astype(o_ref.dtype)

    return kernel


# ----------------------------------------------------------------------------
# Forward pass wrapper (single fused pallas_call)
# ----------------------------------------------------------------------------
def baseline_network_forward(x_ncl, params):
    """x_ncl: (N, C, L) as in the PyTorch module -> (N, num_classes)."""
    n, _, seq_len = x_ncl.shape
    convs = params["convs"]
    w_fc1, b_fc1, w_fc2, b_fc2 = params["fc"]
    dim_fc = w_fc1.shape[1]
    n_classes = w_fc2.shape[1]

    # Single tiny NCL -> NLC transpose at the boundary (~1 KB); everything
    # else (padding, all layers, FC head) happens inside the fused kernel.
    x_nlc = jnp.transpose(x_ncl, (0, 2, 1))

    conv_cfg = []
    flat_inputs = [x_nlc]
    for idx, (w, b, k) in enumerate(convs):
        _, cin, cout = w.shape
        pad_l, _ = _same_padding(k)
        conv_cfg.append((k, pad_l, cin, cout))
        if idx < len(convs) - 1:
            flat_inputs += [w, b.reshape(1, cout)]
        else:
            assert cout == 1, "final conv must have a single output channel"
            # (k, cin, 1) -> (k, 1, cin): per-tap row vector for the VPU path.
            flat_inputs += [jnp.transpose(w, (0, 2, 1)), b.reshape(1, 1)]
    flat_inputs += [w_fc1, b_fc1.reshape(1, dim_fc),
                    w_fc2, b_fc2.reshape(1, n_classes)]

    # Padded-slab geometry: interior starts at a sublane-aligned offset so the
    # per-layer interior store is aligned; padding rows stay zero.
    max_pad_l = max(p for (_, p, _, _) in conv_cfg)
    max_pad_r = max(k - 1 - p for (k, p, _, _) in conv_cfg)
    pad_off = max(8, ((max_pad_l + 7) // 8) * 8)
    pad_rows = pad_off + seq_len + max_pad_r
    c_max = max(ci for (_, _, ci, _) in conv_cfg)

    kernel = _build_fused_kernel(conv_cfg, n, seq_len, pad_off)

    return pl.pallas_call(
        kernel,
        out_shape=jax.ShapeDtypeStruct((n, n_classes), x_ncl.dtype),
        grid=(1,),
        in_specs=[_vmem_full_spec(a.shape) for a in flat_inputs],
        out_specs=_vmem_full_spec((n, n_classes)),
        scratch_shapes=[pltpu.VMEM((n, pad_rows, c_max), jnp.float32)],
        compiler_params=pltpu.CompilerParams(
            dimension_semantics=("arbitrary",)),
    )(*flat_inputs)


# ----------------------------------------------------------------------------
# Parameter initialization (deterministic, mirrors the PyTorch __init__)
# ----------------------------------------------------------------------------
def _xavier_uniform(key, shape, fan_in, fan_out, gain):
    bound = gain * math.sqrt(6.0 / (fan_in + fan_out))
    return jax.random.uniform(key, shape, jnp.float32, -bound, bound)


def init_params(key, in_channels, seq_len, base_filters, num_layers,
                kernel_size, num_classes, dim_fc):
    tanh_gain = 5.0 / 3.0  # nn.init.calculate_gain('tanh')
    convs = []
    conv_cfg = [(in_channels, base_filters, kernel_size)]
    for _ in range(2, num_layers):
        conv_cfg.append((base_filters, base_filters, kernel_size))
    conv_cfg.append((base_filters, 1, 3))

    keys = jax.random.split(key, len(conv_cfg) + 2)
    for idx, (cin, cout, k) in enumerate(conv_cfg):
        # Stored tap-major (K, Cin, Cout); fan_in/out as for torch Conv1d.
        w = _xavier_uniform(keys[idx], (k, cin, cout), cin * k, cout * k, tanh_gain)
        b = jnp.zeros((cout,), jnp.float32)
        convs.append((w, b, k))

    w1 = _xavier_uniform(keys[-2], (seq_len, dim_fc), seq_len, dim_fc, tanh_gain)
    b1 = jnp.zeros((dim_fc,), jnp.float32)
    w2 = _xavier_uniform(keys[-1], (dim_fc, num_classes), dim_fc, num_classes, 1.0)
    b2 = jnp.zeros((num_classes,), jnp.float32)
    return {"convs": convs, "fc": (w1, b1, w2, b2)}


# ----------------------------------------------------------------------------
# Independent pure-JAX reference (XLA conv), matching the PyTorch semantics:
# ConstantPad1d((pad_l, pad_r)) + valid Conv1d (cross-correlation) + Tanh.
# ----------------------------------------------------------------------------
def _reference_forward(x_ncl, params):
    x = x_ncl
    for (w, b, k) in params["convs"]:
        pad_l, pad_r = _same_padding(k)
        w_oik = jnp.transpose(w, (2, 1, 0))                 # (Cout, Cin, K)
        x = lax.conv_general_dilated(
            x, w_oik, window_strides=(1,), padding=[(pad_l, pad_r)],
            dimension_numbers=("NCH", "OIH", "NCH"))
        x = jnp.tanh(x + b[None, :, None])
    feat = x[:, 0, :]                                       # Flatten (1 channel)
    w1, b1, w2, b2 = params["fc"]
    h = jnp.tanh(feat @ w1 + b1)
    return h @ w2 + b2


if __name__ == "__main__":
    # Small, module-consistent configuration.
    batch = 2
    in_channels = 4
    seq_len = 32
    base_filters = 8
    num_layers = 3
    num_common_layers = 2   # only used by common_forward/adaption_forward
    kernel_size = 4         # even -> asymmetric padding (1, 2)
    num_classes = 1
    dim_fc = 16
    dropout_rate = 0.5      # inactive at inference

    key = jax.random.PRNGKey(0)
    k_x, k_p = jax.random.split(key)
    x = jax.random.normal(k_x, (batch, in_channels, seq_len), jnp.float32)
    params = init_params(k_p, in_channels, seq_len, base_filters, num_layers,
                         kernel_size, num_classes, dim_fc)

    out = jax.block_until_ready(baseline_network_forward(x, params))
    ref = jax.block_until_ready(_reference_forward(x, params))

    assert out.shape == (batch, num_classes)
    assert jnp.allclose(out, ref, atol=1e-4, rtol=1e-4), (out, ref)

    print("KERNEL_OK")
</pallas_src>

<mosaic_0001>
module attributes {stable_mosaic.version = 11 : i64} {
  func.func @kernel(%arg0: i32, %arg1: memref<2x32x4xf32, #tpu.memory_space<vmem>>, %arg2: memref<4x4x8xf32, #tpu.memory_space<vmem>>, %arg3: memref<1x8xf32, #tpu.memory_space<vmem>>, %arg4: memref<4x8x8xf32, #tpu.memory_space<vmem>>, %arg5: memref<1x8xf32, #tpu.memory_space<vmem>>, %arg6: memref<3x1x8xf32, #tpu.memory_space<vmem>>, %arg7: memref<1x1xf32, #tpu.memory_space<vmem>>, %arg8: memref<32x16xf32, #tpu.memory_space<vmem>>, %arg9: memref<1x16xf32, #tpu.memory_space<vmem>>, %arg10: memref<16x1xf32, #tpu.memory_space<vmem>>, %arg11: memref<1x1xf32, #tpu.memory_space<vmem>>, %arg12: memref<2x1xf32, #tpu.memory_space<vmem>>, %arg13: memref<2x42x8xf32, #tpu.memory_space<vmem>>) attributes {dimension_semantics = [#tpu.dimension_semantics<arbitrary>], iteration_bounds = array<i64: 1>, scalar_prefetch = 0 : i64, scratch_operands = 1 : i64, tpu.core_type = #tpu.core_type<tc>, window_params = [{pipeline_mode = #tpu.pipeline_mode<synchronous>, transform_indices = @transform_0, window_bounds = array<i64: 2, 32, 4>}, {pipeline_mode = #tpu.pipeline_mode<synchronous>, transform_indices = @transform_1, window_bounds = array<i64: 4, 4, 8>}, {pipeline_mode = #tpu.pipeline_mode<synchronous>, transform_indices = @transform_2, window_bounds = array<i64: 1, 8>}, {pipeline_mode = #tpu.pipeline_mode<synchronous>, transform_indices = @transform_3, window_bounds = array<i64: 4, 8, 8>}, {pipeline_mode = #tpu.pipeline_mode<synchronous>, transform_indices = @transform_4, window_bounds = array<i64: 1, 8>}, {pipeline_mode = #tpu.pipeline_mode<synchronous>, transform_indices = @transform_5, window_bounds = array<i64: 3, 1, 8>}, {pipeline_mode = #tpu.pipeline_mode<synchronous>, transform_indices = @transform_6, window_bounds = array<i64: 1, 1>}, {pipeline_mode = #tpu.pipeline_mode<synchronous>, transform_indices = @transform_7, window_bounds = array<i64: 32, 16>}, {pipeline_mode = #tpu.pipeline_mode<synchronous>, transform_indices = @transform_8, window_bounds = array<i64: 1, 16>}, {pipeline_mode = #tpu.pipeline_mode<synchronous>, transform_indices = @transform_9, window_bounds = array<i64: 16, 1>}, {pipeline_mode = #tpu.pipeline_mode<synchronous>, transform_indices = @transform_10, window_bounds = array<i64: 1, 1>}, {pipeline_mode = #tpu.pipeline_mode<synchronous>, transform_indices = @transform_11, window_bounds = array<i64: 2, 1>}]} {
    %cst = arith.constant 0.000000e+00 : f32
    %0 = vector.broadcast %cst : f32 to vector<2x42x8xf32>
    %c0 = arith.constant 0 : index
    %c0_0 = arith.constant 0 : index
    %c0_1 = arith.constant 0 : index
    %1 = vector.load %arg13[%c0, %c0_0, %c0_1] : memref<2x42x8xf32, #tpu.memory_space<vmem>>, vector<2x42x8xf32>
    tpu.vector_store %arg13[%c0, %c0_0, %c0_1], %0 {strides = array<i32>} : memref<2x42x8xf32, #tpu.memory_space<vmem>>, vector<2x42x8xf32>,
    %c0_2 = arith.constant 0 : index
    %c0_3 = arith.constant 0 : index
    %c0_4 = arith.constant 0 : index
    %2 = vector.load %arg1[%c0_2, %c0_3, %c0_4] : memref<2x32x4xf32, #tpu.memory_space<vmem>>, vector<2x32x4xf32>
    %c0_5 = arith.constant 0 : index
    %c8 = arith.constant 8 : index
    %c0_6 = arith.constant 0 : index
    %3 = vector.load %arg13[%c0_5, %c8, %c0_6] : memref<2x42x8xf32, #tpu.memory_space<vmem>>, vector<2x32x4xf32>
    tpu.vector_store %arg13[%c0_5, %c8, %c0_6], %2 {strides = array<i32>} : memref<2x42x8xf32, #tpu.memory_space<vmem>>, vector<2x32x4xf32>,
    %c0_7 = arith.constant 0 : index
    %c0_8 = arith.constant 0 : index
    %4 = vector.load %arg3[%c0_7, %c0_8] : memref<1x8xf32, #tpu.memory_space<vmem>>, vector<1x8xf32>
    %5 = vector.shape_cast %4 : vector<1x8xf32> to vector<1x8xf32>
    %6 = vector.broadcast %5 : vector<1x8xf32> to vector<64x8xf32>
    %c0_9 = arith.constant 0 : index
    %c7 = arith.constant 7 : index
    %c0_10 = arith.constant 0 : index
    %7 = vector.load %arg13[%c0_9, %c7, %c0_10] : memref<2x42x8xf32, #tpu.memory_space<vmem>>, vector<2x32x4xf32>
    %8 = vector.shape_cast %7 : vector<2x32x4xf32> to vector<64x4xf32>
    %c0_11 = arith.constant 0 : index
    %c0_12 = arith.constant 0 : index
    %c0_13 = arith.constant 0 : index
    %9 = vector.load %arg2[%c0_11, %c0_12, %c0_13] : memref<4x4x8xf32, #tpu.memory_space<vmem>>, vector<1x4x8xf32>
    %10 = vector.shape_cast %9 : vector<1x4x8xf32> to vector<4x8xf32>
    %cst_14 = arith.constant dense<0.000000e+00> : vector<64x8xf32>
    %11 = tpu.matmul %8, %10, %cst_14 {dimension_numbers = #tpu.dot_dimension_numbers<[1], [0], [0], [1], [0, 0, 1, 1], [], []>} : vector<64x4xf32>, vector<4x8xf32>, vector<64x8xf32> -> vector<64x8xf32>
    %12 = arith.addf %6, %11 : vector<64x8xf32>
    %c0_15 = arith.constant 0 : index
    %c8_16 = arith.constant 8 : index
    %c0_17 = arith.constant 0 : index
    %13 = vector.load %arg13[%c0_15, %c8_16, %c0_17] : memref<2x42x8xf32, #tpu.memory_space<vmem>>, vector<2x32x4xf32>
    %14 = vector.shape_cast %13 : vector<2x32x4xf32> to vector<64x4xf32>
    %c1 = arith.constant 1 : index
    %c0_18 = arith.constant 0 : index
    %c0_19 = arith.constant 0 : index
    %15 = vector.load %arg2[%c1, %c0_18, %c0_19] : memref<4x4x8xf32, #tpu.memory_space<vmem>>, vector<1x4x8xf32>
    %16 = vector.shape_cast %15 : vector<1x4x8xf32> to vector<4x8xf32>
    %cst_20 = arith.constant dense<0.000000e+00> : vector<64x8xf32>
    %17 = tpu.matmul %14, %16, %cst_20 {dimension_numbers = #tpu.dot_dimension_numbers<[1], [0], [0], [1], [0, 0, 1, 1], [], []>} : vector<64x4xf32>, vector<4x8xf32>, vector<64x8xf32> -> vector<64x8xf32>
    %18 = arith.addf %12, %17 : vector<64x8xf32>
    %c0_21 = arith.constant 0 : index
    %c9 = arith.constant 9 : index
    %c0_22 = arith.constant 0 : index
    %19 = vector.load %arg13[%c0_21, %c9, %c0_22] : memref<2x42x8xf32, #tpu.memory_space<vmem>>, vector<2x32x4xf32>
    %20 = vector.shape_cast %19 : vector<2x32x4xf32> to vector<64x4xf32>
    %c2 = arith.constant 2 : index
    %c0_23 = arith.constant 0 : index
    %c0_24 = arith.constant 0 : index
    %21 = vector.load %arg2[%c2, %c0_23, %c0_24] : memref<4x4x8xf32, #tpu.memory_space<vmem>>, vector<1x4x8xf32>
    %22 = vector.shape_cast %21 : vector<1x4x8xf32> to vector<4x8xf32>
    %cst_25 = arith.constant dense<0.000000e+00> : vector<64x8xf32>
    %23 = tpu.matmul %20, %22, %cst_25 {dimension_numbers = #tpu.dot_dimension_numbers<[1], [0], [0], [1], [0, 0, 1, 1], [], []>} : vector<64x4xf32>, vector<4x8xf32>, vector<64x8xf32> -> vector<64x8xf32>
    %24 = arith.addf %18, %23 : vector<64x8xf32>
    %c0_26 = arith.constant 0 : index
    %c10 = arith.constant 10 : index
    %c0_27 = arith.constant 0 : index
    %25 = vector.load %arg13[%c0_26, %c10, %c0_27] : memref<2x42x8xf32, #tpu.memory_space<vmem>>, vector<2x32x4xf32>
    %26 = vector.shape_cast %25 : vector<2x32x4xf32> to vector<64x4xf32>
    %c3 = arith.constant 3 : index
    %c0_28 = arith.constant 0 : index
    %c0_29 = arith.constant 0 : index
    %27 = vector.load %arg2[%c3, %c0_28, %c0_29] : memref<4x4x8xf32, #tpu.memory_space<vmem>>, vector<1x4x8xf32>
    %28 = vector.shape_cast %27 : vector<1x4x8xf32> to vector<4x8xf32>
    %cst_30 = arith.constant dense<0.000000e+00> : vector<64x8xf32>
    %29 = tpu.matmul %26, %28, %cst_30 {dimension_numbers = #tpu.dot_dimension_numbers<[1], [0], [0], [1], [0, 0, 1, 1], [], []>} : vector<64x4xf32>, vector<4x8xf32>, vector<64x8xf32> -> vector<64x8xf32>
    %30 = arith.addf %24, %29 : vector<64x8xf32>
    %31 = math.tanh %30 : vector<64x8xf32>
    %32 = vector.shape_cast %31 : vector<64x8xf32> to vector<2x32x8xf32>
    %c0_31 = arith.constant 0 : index
    %c8_32 = arith.constant 8 : index
    %c0_33 = arith.constant 0 : index
    %33 = vector.load %arg13[%c0_31, %c8_32, %c0_33] : memref<2x42x8xf32, #tpu.memory_space<vmem>>, vector<2x32x8xf32>
    tpu.vector_store %arg13[%c0_31, %c8_32, %c0_33], %32 {strides = array<i32>} : memref<2x42x8xf32, #tpu.memory_space<vmem>>, vector<2x32x8xf32>,
    %c0_34 = arith.constant 0 : index
    %c0_35 = arith.constant 0 : index
    %34 = vector.load %arg5[%c0_34, %c0_35] : memref<1x8xf32, #tpu.memory_space<vmem>>, vector<1x8xf32>
    %35 = vector.shape_cast %34 : vector<1x8xf32> to vector<1x8xf32>
    %36 = vector.broadcast %35 : vector<1x8xf32> to vector<64x8xf32>
    %c0_36 = arith.constant 0 : index
    %c7_37 = arith.constant 7 : index
    %c0_38 = arith.constant 0 : index
    %37 = vector.load %arg13[%c0_36, %c7_37, %c0_38] : memref<2x42x8xf32, #tpu.memory_space<vmem>>, vector<2x32x8xf32>
    %38 = vector.shape_cast %37 : vector<2x32x8xf32> to vector<64x8xf32>
    %c0_39 = arith.constant 0 : index
    %c0_40 = arith.constant 0 : index
    %c0_41 = arith.constant 0 : index
    %39 = vector.load %arg4[%c0_39, %c0_40, %c0_41] : memref<4x8x8xf32, #tpu.memory_space<vmem>>, vector<1x8x8xf32>
    %40 = vector.shape_cast %39 : vector<1x8x8xf32> to vector<8x8xf32>
    %cst_42 = arith.constant dense<0.000000e+00> : vector<64x8xf32>
    %41 = tpu.matmul %38, %40, %cst_42 {dimension_numbers = #tpu.dot_dimension_numbers<[1], [0], [0], [1], [0, 0, 1, 1], [], []>} : vector<64x8xf32>, vector<8x8xf32>, vector<64x8xf32> -> vector<64x8xf32>
    %42 = arith.addf %36, %41 : vector<64x8xf32>
    %c0_43 = arith.constant 0 : index
    %c8_44 = arith.constant 8 : index
    %c0_45 = arith.constant 0 : index
    %43 = vector.load %arg13[%c0_43, %c8_44, %c0_45] : memref<2x42x8xf32, #tpu.memory_space<vmem>>, vector<2x32x8xf32>
    %44 = vector.shape_cast %43 : vector<2x32x8xf32> to vector<64x8xf32>
    %c1_46 = arith.constant 1 : index
    %c0_47 = arith.constant 0 : index
    %c0_48 = arith.constant 0 : index
    %45 = vector.load %arg4[%c1_46, %c0_47, %c0_48] : memref<4x8x8xf32, #tpu.memory_space<vmem>>, vector<1x8x8xf32>
    %46 = vector.shape_cast %45 : vector<1x8x8xf32> to vector<8x8xf32>
    %cst_49 = arith.constant dense<0.000000e+00> : vector<64x8xf32>
    %47 = tpu.matmul %44, %46, %cst_49 {dimension_numbers = #tpu.dot_dimension_numbers<[1], [0], [0], [1], [0, 0, 1, 1], [], []>} : vector<64x8xf32>, vector<8x8xf32>, vector<64x8xf32> -> vector<64x8xf32>
    %48 = arith.addf %42, %47 : vector<64x8xf32>
    %c0_50 = arith.constant 0 : index
    %c9_51 = arith.constant 9 : index
    %c0_52 = arith.constant 0 : index
    %49 = vector.load %arg13[%c0_50, %c9_51, %c0_52] : memref<2x42x8xf32, #tpu.memory_space<vmem>>, vector<2x32x8xf32>
    %50 = vector.shape_cast %49 : vector<2x32x8xf32> to vector<64x8xf32>
    %c2_53 = arith.constant 2 : index
    %c0_54 = arith.constant 0 : index
    %c0_55 = arith.constant 0 : index
    %51 = vector.load %arg4[%c2_53, %c0_54, %c0_55] : memref<4x8x8xf32, #tpu.memory_space<vmem>>, vector<1x8x8xf32>
    %52 = vector.shape_cast %51 : vector<1x8x8xf32> to vector<8x8xf32>
    %cst_56 = arith.constant dense<0.000000e+00> : vector<64x8xf32>
    %53 = tpu.matmul %50, %52, %cst_56 {dimension_numbers = #tpu.dot_dimension_numbers<[1], [0], [0], [1], [0, 0, 1, 1], [], []>} : vector<64x8xf32>, vector<8x8xf32>, vector<64x8xf32> -> vector<64x8xf32>
    %54 = arith.addf %48, %53 : vector<64x8xf32>
    %c0_57 = arith.constant 0 : index
    %c10_58 = arith.constant 10 : index
    %c0_59 = arith.constant 0 : index
    %55 = vector.load %arg13[%c0_57, %c10_58, %c0_59] : memref<2x42x8xf32, #tpu.memory_space<vmem>>, vector<2x32x8xf32>
    %56 = vector.shape_cast %55 : vector<2x32x8xf32> to vector<64x8xf32>
    %c3_60 = arith.constant 3 : index
    %c0_61 = arith.constant 0 : index
    %c0_62 = arith.constant 0 : index
    %57 = vector.load %arg4[%c3_60, %c0_61, %c0_62] : memref<4x8x8xf32, #tpu.memory_space<vmem>>, vector<1x8x8xf32>
    %58 = vector.shape_cast %57 : vector<1x8x8xf32> to vector<8x8xf32>
    %cst_63 = arith.constant dense<0.000000e+00> : vector<64x8xf32>
    %59 = tpu.matmul %56, %58, %cst_63 {dimension_numbers = #tpu.dot_dimension_numbers<[1], [0], [0], [1], [0, 0, 1, 1], [], []>} : vector<64x8xf32>, vector<8x8xf32>, vector<64x8xf32> -> vector<64x8xf32>
    %60 = arith.addf %54, %59 : vector<64x8xf32>
    %61 = math.tanh %60 : vector<64x8xf32>
    %62 = vector.shape_cast %61 : vector<64x8xf32> to vector<2x32x8xf32>
    %c0_64 = arith.constant 0 : index
    %c8_65 = arith.constant 8 : index
    %c0_66 = arith.constant 0 : index
    %63 = vector.load %arg13[%c0_64, %c8_65, %c0_66] : memref<2x42x8xf32, #tpu.memory_space<vmem>>, vector<2x32x8xf32>
    tpu.vector_store %arg13[%c0_64, %c8_65, %c0_66], %62 {strides = array<i32>} : memref<2x42x8xf32, #tpu.memory_space<vmem>>, vector<2x32x8xf32>,
    %c0_67 = arith.constant 0 : index
    %c0_68 = arith.constant 0 : index
    %64 = vector.load %arg7[%c0_67, %c0_68] : memref<1x1xf32, #tpu.memory_space<vmem>>, vector<1x1xf32>
    %65 = vector.shape_cast %64 : vector<1x1xf32> to vector<1x1xf32>
    %66 = vector.broadcast %65 : vector<1x1xf32> to vector<2x32xf32>
    %c0_69 = arith.constant 0 : index
    %c7_70 = arith.constant 7 : index
    %c0_71 = arith.constant 0 : index
    %67 = vector.load %arg13[%c0_69, %c7_70, %c0_71] : memref<2x42x8xf32, #tpu.memory_space<vmem>>, vector<2x32x8xf32>
    %c0_72 = arith.constant 0 : index
    %c0_73 = arith.constant 0 : index
    %c0_74 = arith.constant 0 : index
    %68 = vector.load %arg6[%c0_72, %c0_73, %c0_74] : memref<3x1x8xf32, #tpu.memory_space<vmem>>, vector<1x1x8xf32>
    %69 = vector.shape_cast %68 : vector<1x1x8xf32> to vector<1x8xf32>
    %70 = vector.shape_cast %69 : vector<1x8xf32> to vector<1x1x8xf32>
    %71 = vector.broadcast %70 : vector<1x1x8xf32> to vector<2x32x8xf32>
    %72 = arith.mulf %67, %71 : vector<2x32x8xf32>
    %cst_75 = arith.constant dense<0.000000e+00> : vector<2x32xf32>
    %73 = vector.multi_reduction <add>, %72, %cst_75 [2] : vector<2x32x8xf32> to vector<2x32xf32>
    %74 = arith.addf %66, %73 : vector<2x32xf32>
    %c0_76 = arith.constant 0 : index
    %c8_77 = arith.constant 8 : index
    %c0_78 = arith.constant 0 : index
    %75 = vector.load %arg13[%c0_76, %c8_77, %c0_78] : memref<2x42x8xf32, #tpu.memory_space<vmem>>, vector<2x32x8xf32>
    %c1_79 = arith.constant 1 : index
    %c0_80 = arith.constant 0 : index
    %c0_81 = arith.constant 0 : index
    %76 = vector.load %arg6[%c1_79, %c0_80, %c0_81] : memref<3x1x8xf32, #tpu.memory_space<vmem>>, vector<1x1x8xf32>
    %77 = vector.shape_cast %76 : vector<1x1x8xf32> to vector<1x8xf32>
    %78 = vector.shape_cast %77 : vector<1x8xf32> to vector<1x1x8xf32>
    %79 = vector.broadcast %78 : vector<1x1x8xf32> to vector<2x32x8xf32>
    %80 = arith.mulf %75, %79 : vector<2x32x8xf32>
    %cst_82 = arith.constant dense<0.000000e+00> : vector<2x32xf32>
    %81 = vector.multi_reduction <add>, %80, %cst_82 [2] : vector<2x32x8xf32> to vector<2x32xf32>
    %82 = arith.addf %74, %81 : vector<2x32xf32>
    %c0_83 = arith.constant 0 : index
    %c9_84 = arith.constant 9 : index
    %c0_85 = arith.constant 0 : index
    %83 = vector.load %arg13[%c0_83, %c9_84, %c0_85] : memref<2x42x8xf32, #tpu.memory_space<vmem>>, vector<2x32x8xf32>
    %c2_86 = arith.constant 2 : index
    %c0_87 = arith.constant 0 : index
    %c0_88 = arith.constant 0 : index
    %84 = vector.load %arg6[%c2_86, %c0_87, %c0_88] : memref<3x1x8xf32, #tpu.memory_space<vmem>>, vector<1x1x8xf32>
    %85 = vector.shape_cast %84 : vector<1x1x8xf32> to vector<1x8xf32>
    %86 = vector.shape_cast %85 : vector<1x8xf32> to vector<1x1x8xf32>
    %87 = vector.broadcast %86 : vector<1x1x8xf32> to vector<2x32x8xf32>
    %88 = arith.mulf %83, %87 : vector<2x32x8xf32>
    %cst_89 = arith.constant dense<0.000000e+00> : vector<2x32xf32>
    %89 = vector.multi_reduction <add>, %88, %cst_89 [2] : vector<2x32x8xf32> to vector<2x32xf32>
    %90 = arith.addf %82, %89 : vector<2x32xf32>
    %91 = math.tanh %90 : vector<2x32xf32>
    %c0_90 = arith.constant 0 : index
    %c0_91 = arith.constant 0 : index
    %92 = vector.load %arg8[%c0_90, %c0_91] : memref<32x16xf32, #tpu.memory_space<vmem>>, vector<32x16xf32>
    %cst_92 = arith.constant dense<0.000000e+00> : vector<2x16xf32>
    %93 = tpu.matmul %91, %92, %cst_92 {dimension_numbers = #tpu.dot_dimension_numbers<[1], [0], [0], [1], [0, 0, 1, 1], [], []>} : vector<2x32xf32>, vector<32x16xf32>, vector<2x16xf32> -> vector<2x16xf32>
    %c0_93 = arith.constant 0 : index
    %c0_94 = arith.constant 0 : index
    %94 = vector.load %arg9[%c0_93, %c0_94] : memref<1x16xf32, #tpu.memory_space<vmem>>, vector<1x16xf32>
    %95 = vector.broadcast %94 : vector<1x16xf32> to vector<2x16xf32>
    %96 = arith.addf %93, %95 : vector<2x16xf32>
    %97 = math.tanh %96 : vector<2x16xf32>
    %c0_95 = arith.constant 0 : index
    %c0_96 = arith.constant 0 : index
    %98 = vector.load %arg10[%c0_95, %c0_96] : memref<16x1xf32, #tpu.memory_space<vmem>>, vector<16x1xf32>
    %cst_97 = arith.constant dense<0.000000e+00> : vector<2x1xf32>
    %99 = tpu.matmul %97, %98, %cst_97 {dimension_numbers = #tpu.dot_dimension_numbers<[1], [0], [0], [1], [0, 0, 1, 1], [], []>} : vector<2x16xf32>, vector<16x1xf32>, vector<2x1xf32> -> vector<2x1xf32>
    %c0_98 = arith.constant 0 : index
    %c0_99 = arith.constant 0 : index
    %100 = vector.load %arg11[%c0_98, %c0_99] : memref<1x1xf32, #tpu.memory_space<vmem>>, vector<1x1xf32>
    %101 = vector.broadcast %100 : vector<1x1xf32> to vector<2x1xf32>
    %102 = arith.addf %99, %101 : vector<2x1xf32>
    %c0_100 = arith.constant 0 : index
    %c0_101 = arith.constant 0 : index
    %103 = vector.load %arg12[%c0_100, %c0_101] : memref<2x1xf32, #tpu.memory_space<vmem>>, vector<2x1xf32>
    tpu.vector_store %arg12[%c0_100, %c0_101], %102 {strides = array<i32>} : memref<2x1xf32, #tpu.memory_space<vmem>>, vector<2x1xf32>,
    return
  }
  func.func @transform_0(%arg0: i32) -> (i32, i32, i32) {
    %c0_i32 = arith.constant 0 : i32
    %c0_i32_0 = arith.constant 0 : i32
    %c0_i32_1 = arith.constant 0 : i32
    %c0_i32_2 = arith.constant 0 : i32
    return %c0_i32, %c0_i32_0, %c0_i32_1 : i32, i32, i32
  }
  func.func @transform_1(%arg0: i32) -> (i32, i32, i32) {
    %c0_i32 = arith.constant 0 : i32
    %c0_i32_0 = arith.constant 0 : i32
    %c0_i32_1 = arith.constant 0 : i32
    %c0_i32_2 = arith.constant 0 : i32
    return %c0_i32, %c0_i32_0, %c0_i32_1 : i32, i32, i32
  }
  func.func @transform_2(%arg0: i32) -> (i32, i32) {
    %c0_i32 = arith.constant 0 : i32
    %c0_i32_0 = arith.constant 0 : i32
    %c0_i32_1 = arith.constant 0 : i32
    return %c0_i32, %c0_i32_0 : i32, i32
  }
  func.func @transform_3(%arg0: i32) -> (i32, i32, i32) {
    %c0_i32 = arith.constant 0 : i32
    %c0_i32_0 = arith.constant 0 : i32
    %c0_i32_1 = arith.constant 0 : i32
    %c0_i32_2 = arith.constant 0 : i32
    return %c0_i32, %c0_i32_0, %c0_i32_1 : i32, i32, i32
  }
  func.func @transform_4(%arg0: i32) -> (i32, i32) {
    %c0_i32 = arith.constant 0 : i32
    %c0_i32_0 = arith.constant 0 : i32
    %c0_i32_1 = arith.constant 0 : i32
    return %c0_i32, %c0_i32_0 : i32, i32
  }
  func.func @transform_5(%arg0: i32) -> (i32, i32, i32) {
    %c0_i32 = arith.constant 0 : i32
    %c0_i32_0 = arith.constant 0 : i32
    %c0_i32_1 = arith.constant 0 : i32
    %c0_i32_2 = arith.constant 0 : i32
    return %c0_i32, %c0_i32_0, %c0_i32_1 : i32, i32, i32
  }
  func.func @transform_6(%arg0: i32) -> (i32, i32) {
    %c0_i32 = arith.constant 0 : i32
    %c0_i32_0 = arith.constant 0 : i32
    %c0_i32_1 = arith.constant 0 : i32
    return %c0_i32, %c0_i32_0 : i32, i32
  }
  func.func @transform_7(%arg0: i32) -> (i32, i32) {
    %c0_i32 = arith.constant 0 : i32
    %c0_i32_0 = arith.constant 0 : i32
    %c0_i32_1 = arith.constant 0 : i32
    return %c0_i32, %c0_i32_0 : i32, i32
  }
  func.func @transform_8(%arg0: i32) -> (i32, i32) {
    %c0_i32 = arith.constant 0 : i32
    %c0_i32_0 = arith.constant 0 : i32
    %c0_i32_1 = arith.constant 0 : i32
    return %c0_i32, %c0_i32_0 : i32, i32
  }
  func.func @transform_9(%arg0: i32) -> (i32, i32) {
    %c0_i32 = arith.constant 0 : i32
    %c0_i32_0 = arith.constant 0 : i32
    %c0_i32_1 = arith.constant 0 : i32
    return %c0_i32, %c0_i32_0 : i32, i32
  }
  func.func @transform_10(%arg0: i32) -> (i32, i32) {
    %c0_i32 = arith.constant 0 : i32
    %c0_i32_0 = arith.constant 0 : i32
    %c0_i32_1 = arith.constant 0 : i32
    return %c0_i32, %c0_i32_0 : i32, i32
  }
  func.func @transform_11(%arg0: i32) -> (i32, i32) {
    %c0_i32 = arith.constant 0 : i32
    %c0_i32_0 = arith.constant 0 : i32
    %c0_i32_1 = arith.constant 0 : i32
    return %c0_i32, %c0_i32_0 : i32, i32
  }
}

</mosaic_0001>

<llo_original>
// kernel: tpu_custom_call.1
$region0: #{tpu_custom_call.1}
  #allocation0 [shape = 'u32[]', space=smem, size = 0x4, offset = 0x4, fixed_abs, tag = 'smem constant byte address 0x4 - core index']
  #allocation1 [shape = 'u32[144,128]{1,0:T(1,128)}', space=vmem, size = 0x12000, scoped, tag = 'internal scratch']
  #allocation2 [shape = 'f32[2,42,8]{2,1,0:T(8,128)}', space=vmem, size = 0xc000, scoped, tag = 'scratch operand']
  #allocation3 [shape = 'f32[1,1]{1,0:T(1,128)S(1)}', space=vmem, size = 0x200, scoped, tag = 'scoped memory for tpu_custom_call.1']
  #allocation4 [shape = 'f32[1,1]{1,0:T(1,128)S(1)}', space=vmem, size = 0x200, scoped, tag = 'scoped memory for tpu_custom_call.1']
  %s0 = inlined_call_operand.vmem [shape: f32[2,32,4], index: 0, kind: input, shape index: {}]
  %s1 = inlined_call_operand.vmem [shape: f32[4,4,8], index: 1, kind: input, shape index: {}]
  %s2 = inlined_call_operand.vmem [shape: f32[1,8], index: 2, kind: input, shape index: {}]
  %s3 = inlined_call_operand.vmem [shape: f32[4,8,8], index: 3, kind: input, shape index: {}]
  %s4 = inlined_call_operand.vmem [shape: f32[1,8], index: 4, kind: input, shape index: {}]
  %s5 = inlined_call_operand.vmem [shape: f32[3,1,8], index: 5, kind: input, shape index: {}]
  %s6 = inlined_call_operand.<no memory space> [shape: f32[1,1], index: 6, kind: input, shape index: {}]
  %s7 = inlined_call_operand.vmem [shape: f32[32,16], index: 7, kind: input, shape index: {}]
  %s8 = inlined_call_operand.vmem [shape: f32[1,16], index: 8, kind: input, shape index: {}]
  %s9 = inlined_call_operand.vmem [shape: f32[16,1], index: 9, kind: input, shape index: {}]
  %s10 = inlined_call_operand.<no memory space> [shape: f32[1,1], index: 10, kind: input, shape index: {}]
  %s11 = inlined_call_operand.vmem [shape: f32[2,1], index: 11, kind: output, shape index: {}]
  %s12 = sld [smem:[#allocation0]]
  $region54: #{tpu_custom_call.1} parent=0
    _
  %s14 = ssub.s32 1, %s12
  %s15 = scalar_select 0, %s14, %s12
  %v16 = vstv %s6
  %17 = vst [vmem:[#allocation3] sm:$0x1] %v16
  %v18 = vstv %s10
  %19 = vst [vmem:[#allocation4] sm:$0x1] %v18
  // Predicated region
  $region2: #{tpu_custom_call.1} parent=0 // pred_check
    _
  $region3: #{tpu_custom_call.1} parent=0 // pred_check_branch
    %21 = sbr.rel (0) target = $region5
  $region4: #{tpu_custom_call.1} parent=0 // pred_region
    _
  $region5: #{tpu_custom_call.1} parent=0 // pred_fallthru
    _
  // Predicated region
  $region6: #{tpu_custom_call.1} parent=0 // pred_check
    _
  $region7: #{tpu_custom_call.1} parent=0 // pred_check_branch
    %23 = sbr.rel (0) target = $region9
  $region8: #{tpu_custom_call.1} parent=0 // pred_region
    _
  $region9: #{tpu_custom_call.1} parent=0 // pred_fallthru
    _
  // Predicated region
  $region10: #{tpu_custom_call.1} parent=0 // pred_check
    _
  $region11: #{tpu_custom_call.1} parent=0 // pred_check_branch
    %25 = sbr.rel (0) target = $region13
  $region12: #{tpu_custom_call.1} parent=0 // pred_region
    _
  $region13: #{tpu_custom_call.1} parent=0 // pred_fallthru
    _
  // Predicated region
  $region14: #{tpu_custom_call.1} parent=0 // pred_check
    _
  $region15: #{tpu_custom_call.1} parent=0 // pred_check_branch
    %27 = sbr.rel (0) target = $region17
  $region16: #{tpu_custom_call.1} parent=0 // pred_region
    _
  $region17: #{tpu_custom_call.1} parent=0 // pred_fallthru
    _
  // Predicated region
  $region18: #{tpu_custom_call.1} parent=0 // pred_check
    _
  $region19: #{tpu_custom_call.1} parent=0 // pred_check_branch
    %29 = sbr.rel (0) target = $region21
  $region20: #{tpu_custom_call.1} parent=0 // pred_region
    _
  $region21: #{tpu_custom_call.1} parent=0 // pred_fallthru
    _
  // Predicated region
  $region22: #{tpu_custom_call.1} parent=0 // pred_check
    _
  $region23: #{tpu_custom_call.1} parent=0 // pred_check_branch
    %31 = sbr.rel (0) target = $region25
  $region24: #{tpu_custom_call.1} parent=0 // pred_region
    _
  $region25: #{tpu_custom_call.1} parent=0 // pred_fallthru
    _
  // Predicated region
  $region26: #{tpu_custom_call.1} parent=0 // pred_check
    _
  $region27: #{tpu_custom_call.1} parent=0 // pred_check_branch
    %33 = sbr.rel (0) target = $region29
  $region28: #{tpu_custom_call.1} parent=0 // pred_region
    _
  $region29: #{tpu_custom_call.1} parent=0 // pred_fallthru
    _
  // Predicated region
  $region30: #{tpu_custom_call.1} parent=0 // pred_check
    _
  $region31: #{tpu_custom_call.1} parent=0 // pred_check_branch
    %35 = sbr.rel (0) target = $region33
  $region32: #{tpu_custom_call.1} parent=0 // pred_region
    _
  $region33: #{tpu_custom_call.1} parent=0 // pred_fallthru
    _
  // Predicated region
  $region34: #{tpu_custom_call.1} parent=0 // pred_check
    _
  $region35: #{tpu_custom_call.1} parent=0 // pred_check_branch
    %37 = sbr.rel (0) target = $region37
  $region36: #{tpu_custom_call.1} parent=0 // pred_region
    _
  $region37: #{tpu_custom_call.1} parent=0 // pred_fallthru
    _
  // Predicated region
  $region38: #{tpu_custom_call.1} parent=0 // pred_check
    _
  $region39: #{tpu_custom_call.1} parent=0 // pred_check_branch
    %39 = sbr.rel (0) target = $region41
  $region40: #{tpu_custom_call.1} parent=0 // pred_region
    _
  $region41: #{tpu_custom_call.1} parent=0 // pred_fallthru
    _
  // Predicated region
  $region42: #{tpu_custom_call.1} parent=0 // pred_check
    _
  $region43: #{tpu_custom_call.1} parent=0 // pred_check_branch
    %41 = sbr.rel (0) target = $region45
  $region44: #{tpu_custom_call.1} parent=0 // pred_region
    _
  $region45: #{tpu_custom_call.1} parent=0 // pred_fallthru
    _
  %vm42 = vcmask 64512
  %43 = vst.msk [vmem:[#allocation2] sm:$0xff] %vm42, 0.0
  %44 = vst.msk [vmem:[#allocation2 + $0x8] sm:$0xff] %vm42, 0.0
  %45 = vst.msk [vmem:[#allocation2 + $0x10] sm:$0xff] %vm42, 0.0
  %46 = vst.msk [vmem:[#allocation2 + $0x18] sm:$0xff] %vm42, 0.0
  %47 = vst.msk [vmem:[#allocation2 + $0x20] sm:$0xff] %vm42, 0.0
  %vm48 = vcmask 58368
  %49 = vst.msk [vmem:[#allocation2 + $0x28] sm:$0x3] %vm48, 0.0
  %50 = vst.msk [vmem:[#allocation2 + $0x30] sm:$0xff] %vm42, 0.0
  %51 = vst.msk [vmem:[#allocation2 + $0x38] sm:$0xff] %vm42, 0.0
  %52 = vst.msk [vmem:[#allocation2 + $0x40] sm:$0xff] %vm42, 0.0
  %53 = vst.msk [vmem:[#allocation2 + $0x48] sm:$0xff] %vm42, 0.0
  %54 = vst.msk [vmem:[#allocation2 + $0x50] sm:$0xff] %vm42, 0.0
  %55 = vst.msk [vmem:[#allocation2 + $0x58] sm:$0x3] %vm48, 0.0
  %v56 = vld [vmem:[%s0] sm:$0xff]
  %v57 = vld [vmem:[%s0 + $0x8] sm:$0xff]
  %v58 = vld [vmem:[%s0 + $0x10] sm:$0xff]
  %v59 = vld [vmem:[%s0 + $0x18] sm:$0xff]
  %v60 = vld [vmem:[%s0 + $0x20] sm:$0xff]
  %v61 = vld [vmem:[%s0 + $0x28] sm:$0xff]
  %v62 = vld [vmem:[%s0 + $0x30] sm:$0xff]
  %v63 = vld [vmem:[%s0 + $0x38] sm:$0xff]
  %vm64 = vcmask 31744
  %65 = vst.msk [vmem:[#allocation2 + $0x8] sm:$0xff] %vm64, %v56
  %66 = vst.msk [vmem:[#allocation2 + $0x10] sm:$0xff] %vm64, %v57
  %67 = vst.msk [vmem:[#allocation2 + $0x18] sm:$0xff] %vm64, %v58
  %68 = vst.msk [vmem:[#allocation2 + $0x20] sm:$0xff] %vm64, %v59
  %69 = vst.msk [vmem:[#allocation2 + $0x38] sm:$0xff] %vm64, %v60
  %70 = vst.msk [vmem:[#allocation2 + $0x40] sm:$0xff] %vm64, %v61
  %71 = vst.msk [vmem:[#allocation2 + $0x48] sm:$0xff] %vm64, %v62
  %72 = vst.msk [vmem:[#allocation2 + $0x50] sm:$0xff] %vm64, %v63
  %v73 = vld [vmem:[%s2] sm:$0x1]
  %v75 = vlaneseq
  %v76 = vshrl.u32 %v75, 7
  %v77 = vsub.s32 0, %v76
  %v78 = vrot.slane %v73, %v77
  %v80 = vld [vmem:[#allocation2 + $0x7] sm:$0xff]
  %v81 = vld [vmem:[#allocation2 + $0xf] sm:$0xff]
  %v82 = vld [vmem:[#allocation2 + $0x17] sm:$0xff]
  %v83 = vld [vmem:[#allocation2 + $0x1f] sm:$0xff]
  %v84 = vld [vmem:[#allocation2 + $0x37] sm:$0xff]
  %v85 = vld [vmem:[#allocation2 + $0x3f] sm:$0xff]
  %v86 = vld [vmem:[#allocation2 + $0x47] sm:$0xff]
  %v87 = vld [vmem:[#allocation2 + $0x4f] sm:$0xff]
  %v88 = vld [vmem:[%s1] sm:$0xf]
  %v90 = vsel %vm64, %v80, 0
  %v93 = vsel %vm64, %v81, 0
  %v96 = vsel %vm64, %v82, 0
  %v99 = vsel %vm64, %v83, 0
  %v102 = vsel %vm64, %v84, 0
  %v105 = vsel %vm64, %v85, 0
  %v108 = vsel %vm64, %v86, 0
  %v111 = vsel %vm64, %v87, 0
  %vm113 = vcmask 1043456
  %v115 = vsel %vm113, %v88, 0
  %117 = vmatprep.subr.mxu0 0.0
  %118 = vmatpush1.msra.mxu0 %v115
  %119 = vmatprep.subr.mxu0 0.0
  %120 = vmatpush1.msra.mxu0 0.0
  %121 = vmatprep.subr.mxu0 0.0
  %122 = vmatpush1.msra.mxu0 0.0
  %123 = vmatprep.subr.mxu0 0.0
  %124 = vmatpush1.msra.mxu0 0.0
  %125 = vmatprep.subr.mxu0 0.0
  %126 = vmatpush1.msra.mxu0 0.0
  %127 = vmatprep.subr.mxu0 0.0
  %128 = vmatpush1.msra.mxu0 0.0
  %129 = vmatprep.subr.mxu0 0.0
  %130 = vmatpush1.msra.mxu0 0.0
  %131 = vmatprep.subr.mxu0 0.0
  %132 = vmatpush1.msra.mxu0 0.0
  %133 = vmatprep.subr.mxu0 0.0
  %134 = vmatpush1.msra.mxu0 0.0
  %135 = vmatprep.subr.mxu0 0.0
  %136 = vmatpush1.msra.mxu0 0.0
  %137 = vmatprep.subr.mxu0 0.0
  %138 = vmatpush1.msra.mxu0 0.0
  %139 = vmatprep.subr.mxu0 0.0
  %140 = vmatpush1.msra.mxu0 0.0
  %141 = vmatprep.subr.mxu0 0.0
  %142 = vmatpush1.msra.mxu0 0.0
  %143 = vmatprep.subr.mxu0 0.0
  %144 = vmatpush1.msra.mxu0 0.0
  %145 = vmatprep.subr.mxu0 0.0
  %146 = vmatpush1.msra.mxu0 0.0
  %147 = vmatprep.subr.mxu0 0.0
  %148 = vmatpush1.msra.mxu0 0.0
  %149 = vmatprep.subr.mxu0 0.0
  %150 = vmatpush1.msra.mxu0 0.0
  %151 = vmatprep.subr.mxu0 0.0
  %152 = vmatpush1.msra.mxu0 0.0
  %153 = vmatprep.subr.mxu0 0.0
  %154 = vmatpush1.msra.mxu0 0.0
  %155 = vmatprep.subr.mxu0 0.0
  %156 = vmatpush1.msra.mxu0 0.0
  %157 = vmatprep.subr.mxu0 0.0
  %158 = vmatpush1.msra.mxu0 0.0
  %159 = vmatprep.subr.mxu0 0.0
  %160 = vmatpush1.msra.mxu0 0.0
  %161 = vmatprep.subr.mxu0 0.0
  %162 = vmatpush1.msra.mxu0 0.0
  %163 = vmatprep.subr.mxu0 0.0
  %164 = vmatpush1.msra.mxu0 0.0
  %165 = vmatprep.subr.mxu0 0.0
  %166 = vmatpush1.msra.mxu0 0.0
  %167 = vmatprep.subr.mxu0 0.0
  %168 = vmatpush1.msra.mxu0 0.0
  %169 = vmatprep.subr.mxu0 0.0
  %170 = vmatpush1.msra.mxu0 0.0
  %171 = vmatprep.subr.mxu0 0.0
  %172 = vmatpush1.msra.mxu0 0.0
  %173 = vmatprep.subr.mxu0 0.0
  %174 = vmatpush1.msra.mxu0 0.0
  %175 = vmatprep.subr.mxu0 0.0
  %176 = vmatpush1.msra.mxu0 0.0
  %177 = vmatprep.subr.mxu0 0.0
  %178 = vmatpush1.msra.mxu0 0.0
  %179 = vmatprep.subr.mxu0 0.0
  %180 = vmatpush1.msra.mxu0 0.0
  %181 = vmatprep.mubr.f32.mxu0 0.0
  %182 = vmatmul.mubr.f32.gmra.mrb[0].mxu0 %v90
  %v183 = vpop.f32.mrb[0].mxu0
  %v184 = vadd.f32 0.0, %v183
  %v185 = vpop.f32.mrb[0].mxu0
  %186 = vmatprep.mubr.f32.mxu0 0.0
  %187 = vmatmul.mubr.f32.gmra.mrb[0].mxu0 %v93
  %v188 = vpop.f32.mrb[0].mxu0
  %v189 = vadd.f32 0.0, %v188
  %v190 = vpop.f32.mrb[0].mxu0
  %191 = vmatprep.mubr.f32.mxu0 0.0
  %192 = vmatmul.mubr.f32.gmra.mrb[0].mxu0 %v96
  %v193 = vpop.f32.mrb[0].mxu0
  %v194 = vadd.f32 0.0, %v193
  %v195 = vpop.f32.mrb[0].mxu0
  %196 = vmatprep.mubr.f32.mxu0 0.0
  %197 = vmatmul.mubr.f32.gmra.mrb[0].mxu0 %v99
  %v198 = vpop.f32.mrb[0].mxu0
  %v199 = vadd.f32 0.0, %v198
  %v200 = vpop.f32.mrb[0].mxu0
  %201 = vmatprep.mubr.f32.mxu0 0.0
  %202 = vmatmul.mubr.f32.gmra.mrb[0].mxu0 %v102
  %v203 = vpop.f32.mrb[0].mxu0
  %v204 = vadd.f32 0.0, %v203
  %v205 = vpop.f32.mrb[0].mxu0
  %206 = vmatprep.mubr.f32.mxu0 0.0
  %207 = vmatmul.mubr.f32.gmra.mrb[0].mxu0 %v105
  %v208 = vpop.f32.mrb[0].mxu0
  %v209 = vadd.f32 0.0, %v208
  %v210 = vpop.f32.mrb[0].mxu0
  %211 = vmatprep.mubr.f32.mxu0 0.0
  %212 = vmatmul.mubr.f32.gmra.mrb[0].mxu0 %v108
  %v213 = vpop.f32.mrb[0].mxu0
  %v214 = vadd.f32 0.0, %v213
  %v215 = vpop.f32.mrb[0].mxu0
  %216 = vmatprep.mubr.f32.mxu0 0.0
  %217 = vmatmul.mubr.f32.gmra.mrb[0].mxu0 %v111
  %v218 = vpop.f32.mrb[0].mxu0
  %v219 = vadd.f32 0.0, %v218
  %v220 = vpop.f32.mrb[0].mxu0
  %221 = vdwg.mxu0
  %v222 = vadd.f32 %v78, %v184
  %v223 = vadd.f32 %v78, %v189
  %v224 = vadd.f32 %v78, %v194
  %v225 = vadd.f32 %v78, %v199
  %v226 = vadd.f32 %v78, %v204
  %v227 = vadd.f32 %v78, %v209
  %v228 = vadd.f32 %v78, %v214
  %v229 = vadd.f32 %v78, %v219
  %v230 = vld [vmem:[#allocation2 + $0x8] sm:$0xff]
  %v231 = vld [vmem:[#allocation2 + $0x10] sm:$0xff]
  %v232 = vld [vmem:[#allocation2 + $0x18] sm:$0xff]
  %v233 = vld [vmem:[#allocation2 + $0x20] sm:$0xff]
  %v234 = vld [vmem:[#allocation2 + $0x38] sm:$0xff]
  %v235 = vld [vmem:[#allocation2 + $0x40] sm:$0xff]
  %v236 = vld [vmem:[#allocation2 + $0x48] sm:$0xff]
  %v237 = vld [vmem:[#allocation2 + $0x50] sm:$0xff]
  %s238 = scalar_lea.vmem %s1, 4
  %v239 = vld [vmem:[%s238] sm:$0xf]
  %v241 = vsel %vm64, %v230, 0
  %v244 = vsel %vm64, %v231, 0
  %v247 = vsel %vm64, %v232, 0
  %v250 = vsel %vm64, %v233, 0
  %v253 = vsel %vm64, %v234, 0
  %v256 = vsel %vm64, %v235, 0
  %v259 = vsel %vm64, %v236, 0
  %v262 = vsel %vm64, %v237, 0
  %v265 = vsel %vm113, %v239, 0
  %267 = vmatprep.subr.mxu0 0.0
  %268 = vmatpush1.msra.mxu0 %v265
  %269 = vmatprep.subr.mxu0 0.0
  %270 = vmatpush1.msra.mxu0 0.0
  %271 = vmatprep.subr.mxu0 0.0
  %272 = vmatpush1.msra.mxu0 0.0
  %273 = vmatprep.subr.mxu0 0.0
  %274 = vmatpush1.msra.mxu0 0.0
  %275 = vmatprep.subr.mxu0 0.0
  %276 = vmatpush1.msra.mxu0 0.0
  %277 = vmatprep.subr.mxu0 0.0
  %278 = vmatpush1.msra.mxu0 0.0
  %279 = vmatprep.subr.mxu0 0.0
  %280 = vmatpush1.msra.mxu0 0.0
  %281 = vmatprep.subr.mxu0 0.0
  %282 = vmatpush1.msra.mxu0 0.0
  %283 = vmatprep.subr.mxu0 0.0
  %284 = vmatpush1.msra.mxu0 0.0
  %285 = vmatprep.subr.mxu0 0.0
  %286 = vmatpush1.msra.mxu0 0.0
  %287 = vmatprep.subr.mxu0 0.0
  %288 = vmatpush1.msra.mxu0 0.0
  %289 = vmatprep.subr.mxu0 0.0
  %290 = vmatpush1.msra.mxu0 0.0
  %291 = vmatprep.subr.mxu0 0.0
  %292 = vmatpush1.msra.mxu0 0.0
  %293 = vmatprep.subr.mxu0 0.0
  %294 = vmatpush1.msra.mxu0 0.0
  %295 = vmatprep.subr.mxu0 0.0
  %296 = vmatpush1.msra.mxu0 0.0
  %297 = vmatprep.subr.mxu0 0.0
  %298 = vmatpush1.msra.mxu0 0.0
  %299 = vmatprep.subr.mxu0 0.0
  %300 = vmatpush1.msra.mxu0 0.0
  %301 = vmatprep.subr.mxu0 0.0
  %302 = vmatpush1.msra.mxu0 0.0
  %303 = vmatprep.subr.mxu0 0.0
  %304 = vmatpush1.msra.mxu0 0.0
  %305 = vmatprep.subr.mxu0 0.0
  %306 = vmatpush1.msra.mxu0 0.0
  %307 = vmatprep.subr.mxu0 0.0
  %308 = vmatpush1.msra.mxu0 0.0
  %309 = vmatprep.subr.mxu0 0.0
  %310 = vmatpush1.msra.mxu0 0.0
  %311 = vmatprep.subr.mxu0 0.0
  %312 = vmatpush1.msra.mxu0 0.0
  %313 = vmatprep.subr.mxu0 0.0
  %314 = vmatpush1.msra.mxu0 0.0
  %315 = vmatprep.subr.mxu0 0.0
  %316 = vmatpush1.msra.mxu0 0.0
  %317 = vmatprep.subr.mxu0 0.0
  %318 = vmatpush1.msra.mxu0 0.0
  %319 = vmatprep.subr.mxu0 0.0
  %320 = vmatpush1.msra.mxu0 0.0
  %321 = vmatprep.subr.mxu0 0.0
  %322 = vmatpush1.msra.mxu0 0.0
  %323 = vmatprep.subr.mxu0 0.0
  %324 = vmatpush1.msra.mxu0 0.0
  %325 = vmatprep.subr.mxu0 0.0
  %326 = vmatpush1.msra.mxu0 0.0
  %327 = vmatprep.subr.mxu0 0.0
  %328 = vmatpush1.msra.mxu0 0.0
  %329 = vmatprep.subr.mxu0 0.0
  %330 = vmatpush1.msra.mxu0 0.0
  %331 = vmatprep.mubr.f32.mxu0 0.0
  %332 = vmatmul.mubr.f32.gmra.mrb[0].mxu0 %v241
  %v333 = vpop.f32.mrb[0].mxu0
  %v334 = vadd.f32 0.0, %v333
  %v335 = vpop.f32.mrb[0].mxu0
  %336 = vmatprep.mubr.f32.mxu0 0.0
  %337 = vmatmul.mubr.f32.gmra.mrb[0].mxu0 %v244
  %v338 = vpop.f32.mrb[0].mxu0
  %v339 = vadd.f32 0.0, %v338
  %v340 = vpop.f32.mrb[0].mxu0
  %341 = vmatprep.mubr.f32.mxu0 0.0
  %342 = vmatmul.mubr.f32.gmra.mrb[0].mxu0 %v247
  %v343 = vpop.f32.mrb[0].mxu0
  %v344 = vadd.f32 0.0, %v343
  %v345 = vpop.f32.mrb[0].mxu0
  %346 = vmatprep.mubr.f32.mxu0 0.0
  %347 = vmatmul.mubr.f32.gmra.mrb[0].mxu0 %v250
  %v348 = vpop.f32.mrb[0].mxu0
  %v349 = vadd.f32 0.0, %v348
  %v350 = vpop.f32.mrb[0].mxu0
  %351 = vmatprep.mubr.f32.mxu0 0.0
  %352 = vmatmul.mubr.f32.gmra.mrb[0].mxu0 %v253
  %v353 = vpop.f32.mrb[0].mxu0
  %v354 = vadd.f32 0.0, %v353
  %v355 = vpop.f32.mrb[0].mxu0
  %356 = vmatprep.mubr.f32.mxu0 0.0
  %357 = vmatmul.mubr.f32.gmra.mrb[0].mxu0 %v256
  %v358 = vpop.f32.mrb[0].mxu0
  %v359 = vadd.f32 0.0, %v358
  %v360 = vpop.f32.mrb[0].mxu0
  %361 = vmatprep.mubr.f32.mxu0 0.0
  %362 = vmatmul.mubr.f32.gmra.mrb[0].mxu0 %v259
  %v363 = vpop.f32.mrb[0].mxu0
  %v364 = vadd.f32 0.0, %v363
  %v365 = vpop.f32.mrb[0].mxu0
  %366 = vmatprep.mubr.f32.mxu0 0.0
  %367 = vmatmul.mubr.f32.gmra.mrb[0].mxu0 %v262
  %v368 = vpop.f32.mrb[0].mxu0
  %v369 = vadd.f32 0.0, %v368
  %v370 = vpop.f32.mrb[0].mxu0
  %371 = vdwg.mxu0
  %v372 = vadd.f32 %v222, %v334
  %v373 = vadd.f32 %v223, %v339
  %v374 = vadd.f32 %v224, %v344
  %v375 = vadd.f32 %v225, %v349
  %v376 = vadd.f32 %v226, %v354
  %v377 = vadd.f32 %v227, %v359
  %v378 = vadd.f32 %v228, %v364
  %v379 = vadd.f32 %v229, %v369
  %v380 = vld [vmem:[#allocation2 + $0x9] sm:$0xff]
  %v381 = vld [vmem:[#allocation2 + $0x11] sm:$0xff]
  %v382 = vld [vmem:[#allocation2 + $0x19] sm:$0xff]
  %v383 = vld [vmem:[#allocation2 + $0x21] sm:$0xff]
  %v384 = vld [vmem:[#allocation2 + $0x39] sm:$0xff]
  %v385 = vld [vmem:[#allocation2 + $0x41] sm:$0xff]
  %v386 = vld [vmem:[#allocation2 + $0x49] sm:$0xff]
  %v387 = vld [vmem:[#allocation2 + $0x51] sm:$0xff]
  %s388 = scalar_lea.vmem %s1, 8
  %v389 = vld [vmem:[%s388] sm:$0xf]
  %v391 = vsel %vm64, %v380, 0
  %v394 = vsel %vm64, %v381, 0
  %v397 = vsel %vm64, %v382, 0
  %v400 = vsel %vm64, %v383, 0
  %v403 = vsel %vm64, %v384, 0
  %v406 = vsel %vm64, %v385, 0
  %v409 = vsel %vm64, %v386, 0
  %v412 = vsel %vm64, %v387, 0
  %v415 = vsel %vm113, %v389, 0
  %417 = vmatprep.subr.mxu0 0.0
  %418 = vmatpush1.msra.mxu0 %v415
  %419 = vmatprep.subr.mxu0 0.0
  %420 = vmatpush1.msra.mxu0 0.0
  %421 = vmatprep.subr.mxu0 0.0
  %422 = vmatpush1.msra.mxu0 0.0
  %423 = vmatprep.subr.mxu0 0.0
  %424 = vmatpush1.msra.mxu0 0.0
  %425 = vmatprep.subr.mxu0 0.0
  %426 = vmatpush1.msra.mxu0 0.0
  %427 = vmatprep.subr.mxu0 0.0
  %428 = vmatpush1.msra.mxu0 0.0
  %429 = vmatprep.subr.mxu0 0.0
  %430 = vmatpush1.msra.mxu0 0.0
  %431 = vmatprep.subr.mxu0 0.0
  %432 = vmatpush1.msra.mxu0 0.0
  %433 = vmatprep.subr.mxu0 0.0
  %434 = vmatpush1.msra.mxu0 0.0
  %435 = vmatprep.subr.mxu0 0.0
  %436 = vmatpush1.msra.mxu0 0.0
  %437 = vmatprep.subr.mxu0 0.0
  %438 = vmatpush1.msra.mxu0 0.0
  %439 = vmatprep.subr.mxu0 0.0
  %440 = vmatpush1.msra.mxu0 0.0
  %441 = vmatprep.subr.mxu0 0.0
  %442 = vmatpush1.msra.mxu0 0.0
  %443 = vmatprep.subr.mxu0 0.0
  %444 = vmatpush1.msra.mxu0 0.0
  %445 = vmatprep.subr.mxu0 0.0
  %446 = vmatpush1.msra.mxu0 0.0
  %447 = vmatprep.subr.mxu0 0.0
  %448 = vmatpush1.msra.mxu0 0.0
  %449 = vmatprep.subr.mxu0 0.0
  %450 = vmatpush1.msra.mxu0 0.0
  %451 = vmatprep.subr.mxu0 0.0
  %452 = vmatpush1.msra.mxu0 0.0
  %453 = vmatprep.subr.mxu0 0.0
  %454 = vmatpush1.msra.mxu0 0.0
  %455 = vmatprep.subr.mxu0 0.0
  %456 = vmatpush1.msra.mxu0 0.0
  %457 = vmatprep.subr.mxu0 0.0
  %458 = vmatpush1.msra.mxu0 0.0
  %459 = vmatprep.subr.mxu0 0.0
  %460 = vmatpush1.msra.mxu0 0.0
  %461 = vmatprep.subr.mxu0 0.0
  %462 = vmatpush1.msra.mxu0 0.0
  %463 = vmatprep.subr.mxu0 0.0
  %464 = vmatpush1.msra.mxu0 0.0
  %465 = vmatprep.subr.mxu0 0.0
  %466 = vmatpush1.msra.mxu0 0.0
  %467 = vmatprep.subr.mxu0 0.0
  %468 = vmatpush1.msra.mxu0 0.0
  %469 = vmatprep.subr.mxu0 0.0
  %470 = vmatpush1.msra.mxu0 0.0
  %471 = vmatprep.subr.mxu0 0.0
  %472 = vmatpush1.msra.mxu0 0.0
  %473 = vmatprep.subr.mxu0 0.0
  %474 = vmatpush1.msra.mxu0 0.0
  %475 = vmatprep.subr.mxu0 0.0
  %476 = vmatpush1.msra.mxu0 0.0
  %477 = vmatprep.subr.mxu0 0.0
  %478 = vmatpush1.msra.mxu0 0.0
  %479 = vmatprep.subr.mxu0 0.0
  %480 = vmatpush1.msra.mxu0 0.0
  %481 = vmatprep.mubr.f32.mxu0 0.0
  %482 = vmatmul.mubr.f32.gmra.mrb[0].mxu0 %v391
  %v483 = vpop.f32.mrb[0].mxu0
  %v484 = vadd.f32 0.0, %v483
  %v485 = vpop.f32.mrb[0].mxu0
  %486 = vmatprep.mubr.f32.mxu0 0.0
  %487 = vmatmul.mubr.f32.gmra.mrb[0].mxu0 %v394
  %v488 = vpop.f32.mrb[0].mxu0
  %v489 = vadd.f32 0.0, %v488
  %v490 = vpop.f32.mrb[0].mxu0
  %491 = vmatprep.mubr.f32.mxu0 0.0
  %492 = vmatmul.mubr.f32.gmra.mrb[0].mxu0 %v397
  %v493 = vpop.f32.mrb[0].mxu0
  %v494 = vadd.f32 0.0, %v493
  %v495 = vpop.f32.mrb[0].mxu0
  %496 = vmatprep.mubr.f32.mxu0 0.0
  %497 = vmatmul.mubr.f32.gmra.mrb[0].mxu0 %v400
  %v498 = vpop.f32.mrb[0].mxu0
  %v499 = vadd.f32 0.0, %v498
  %v500 = vpop.f32.mrb[0].mxu0
  %501 = vmatprep.mubr.f32.mxu0 0.0
  %502 = vmatmul.mubr.f32.gmra.mrb[0].mxu0 %v403
  %v503 = vpop.f32.mrb[0].mxu0
  %v504 = vadd.f32 0.0, %v503
  %v505 = vpop.f32.mrb[0].mxu0
  %506 = vmatprep.mubr.f32.mxu0 0.0
  %507 = vmatmul.mubr.f32.gmra.mrb[0].mxu0 %v406
  %v508 = vpop.f32.mrb[0].mxu0
  %v509 = vadd.f32 0.0, %v508
  %v510 = vpop.f32.mrb[0].mxu0
  %511 = vmatprep.mubr.f32.mxu0 0.0
  %512 = vmatmul.mubr.f32.gmra.mrb[0].mxu0 %v409
  %v513 = vpop.f32.mrb[0].mxu0
  %v514 = vadd.f32 0.0, %v513
  %v515 = vpop.f32.mrb[0].mxu0
  %516 = vmatprep.mubr.f32.mxu0 0.0
  %517 = vmatmul.mubr.f32.gmra.mrb[0].mxu0 %v412
  %v518 = vpop.f32.mrb[0].mxu0
  %v519 = vadd.f32 0.0, %v518
  %v520 = vpop.f32.mrb[0].mxu0
  %521 = vdwg.mxu0
  %v522 = vadd.f32 %v372, %v484
  %v523 = vadd.f32 %v373, %v489
  %v524 = vadd.f32 %v374, %v494
  %v525 = vadd.f32 %v375, %v499
  %v526 = vadd.f32 %v376, %v504
  %v527 = vadd.f32 %v377, %v509
  %v528 = vadd.f32 %v378, %v514
  %v529 = vadd.f32 %v379, %v519
  %v530 = vld [vmem:[#allocation2 + $0xa] sm:$0xff]
  %v531 = vld [vmem:[#allocation2 + $0x12] sm:$0xff]
  %v532 = vld [vmem:[#allocation2 + $0x1a] sm:$0xff]
  %v533 = vld [vmem:[#allocation2 + $0x22] sm:$0xff]
  %v534 = vld [vmem:[#allocation2 + $0x3a] sm:$0xff]
  %v535 = vld [vmem:[#allocation2 + $0x42] sm:$0xff]
  %v536 = vld [vmem:[#allocation2 + $0x4a] sm:$0xff]
  %v537 = vld [vmem:[#allocation2 + $0x52] sm:$0xff]
  %s538 = scalar_lea.vmem %s1, 12
  %v539 = vld [vmem:[%s538] sm:$0xf]
  %v541 = vsel %vm64, %v530, 0
  %v544 = vsel %vm64, %v531, 0
  %v547 = vsel %vm64, %v532, 0
  %v550 = vsel %vm64, %v533, 0
  %v553 = vsel %vm64, %v534, 0
  %v556 = vsel %vm64, %v535, 0
  %v559 = vsel %vm64, %v536, 0
  %v562 = vsel %vm64, %v537, 0
  %v565 = vsel %vm113, %v539, 0
  %567 = vmatprep.subr.mxu0 0.0
  %568 = vmatpush1.msra.mxu0 %v565
  %569 = vmatprep.subr.mxu0 0.0
  %570 = vmatpush1.msra.mxu0 0.0
  %571 = vmatprep.subr.mxu0 0.0
  %572 = vmatpush1.msra.mxu0 0.0
  %573 = vmatprep.subr.mxu0 0.0
  %574 = vmatpush1.msra.mxu0 0.0
  %575 = vmatprep.subr.mxu0 0.0
  %576 = vmatpush1.msra.mxu0 0.0
  %577 = vmatprep.subr.mxu0 0.0
  %578 = vmatpush1.msra.mxu0 0.0
  %579 = vmatprep.subr.mxu0 0.0
  %580 = vmatpush1.msra.mxu0 0.0
  %581 = vmatprep.subr.mxu0 0.0
  %582 = vmatpush1.msra.mxu0 0.0
  %583 = vmatprep.subr.mxu0 0.0
  %584 = vmatpush1.msra.mxu0 0.0
  %585 = vmatprep.subr.mxu0 0.0
  %586 = vmatpush1.msra.mxu0 0.0
  %587 = vmatprep.subr.mxu0 0.0
  %588 = vmatpush1.msra.mxu0 0.0
  %589 = vmatprep.subr.mxu0 0.0
  %590 = vmatpush1.msra.mxu0 0.0
  %591 = vmatprep.subr.mxu0 0.0
  %592 = vmatpush1.msra.mxu0 0.0
  %593 = vmatprep.subr.mxu0 0.0
  %594 = vmatpush1.msra.mxu0 0.0
  %595 = vmatprep.subr.mxu0 0.0
  %596 = vmatpush1.msra.mxu0 0.0
  %597 = vmatprep.subr.mxu0 0.0
  %598 = vmatpush1.msra.mxu0 0.0
  %599 = vmatprep.subr.mxu0 0.0
  %600 = vmatpush1.msra.mxu0 0.0
  %601 = vmatprep.subr.mxu0 0.0
  %602 = vmatpush1.msra.mxu0 0.0
  %603 = vmatprep.subr.mxu0 0.0
  %604 = vmatpush1.msra.mxu0 0.0
  %605 = vmatprep.subr.mxu0 0.0
  %606 = vmatpush1.msra.mxu0 0.0
  %607 = vmatprep.subr.mxu0 0.0
  %608 = vmatpush1.msra.mxu0 0.0
  %609 = vmatprep.subr.mxu0 0.0
  %610 = vmatpush1.msra.mxu0 0.0
  %611 = vmatprep.subr.mxu0 0.0
  %612 = vmatpush1.msra.mxu0 0.0
  %613 = vmatprep.subr.mxu0 0.0
  %614 = vmatpush1.msra.mxu0 0.0
  %615 = vmatprep.subr.mxu0 0.0
  %616 = vmatpush1.msra.mxu0 0.0
  %617 = vmatprep.subr.mxu0 0.0
  %618 = vmatpush1.msra.mxu0 0.0
  %619 = vmatprep.subr.mxu0 0.0
  %620 = vmatpush1.msra.mxu0 0.0
  %621 = vmatprep.subr.mxu0 0.0
  %622 = vmatpush1.msra.mxu0 0.0
  %623 = vmatprep.subr.mxu0 0.0
  %624 = vmatpush1.msra.mxu0 0.0
  %625 = vmatprep.subr.mxu0 0.0
  %626 = vmatpush1.msra.mxu0 0.0
  %627 = vmatprep.subr.mxu0 0.0
  %628 = vmatpush1.msra.mxu0 0.0
  %629 = vmatprep.subr.mxu0 0.0
  %630 = vmatpush1.msra.mxu0 0.0
  %631 = vmatprep.mubr.f32.mxu0 0.0
  %632 = vmatmul.mubr.f32.gmra.mrb[0].mxu0 %v541
  %v633 = vpop.f32.mrb[0].mxu0
  %v634 = vadd.f32 0.0, %v633
  %v635 = vpop.f32.mrb[0].mxu0
  %636 = vmatprep.mubr.f32.mxu0 0.0
  %637 = vmatmul.mubr.f32.gmra.mrb[0].mxu0 %v544
  %v638 = vpop.f32.mrb[0].mxu0
  %v639 = vadd.f32 0.0, %v638
  %v640 = vpop.f32.mrb[0].mxu0
  %641 = vmatprep.mubr.f32.mxu0 0.0
  %642 = vmatmul.mubr.f32.gmra.mrb[0].mxu0 %v547
  %v643 = vpop.f32.mrb[0].mxu0
  %v644 = vadd.f32 0.0, %v643
  %v645 = vpop.f32.mrb[0].mxu0
  %646 = vmatprep.mubr.f32.mxu0 0.0
  %647 = vmatmul.mubr.f32.gmra.mrb[0].mxu0 %v550
  %v648 = vpop.f32.mrb[0].mxu0
  %v649 = vadd.f32 0.0, %v648
  %v650 = vpop.f32.mrb[0].mxu0
  %651 = vmatprep.mubr.f32.mxu0 0.0
  %652 = vmatmul.mubr.f32.gmra.mrb[0].mxu0 %v553
  %v653 = vpop.f32.mrb[0].mxu0
  %v654 = vadd.f32 0.0, %v653
  %v655 = vpop.f32.mrb[0].mxu0
  %656 = vmatprep.mubr.f32.mxu0 0.0
  %657 = vmatmul.mubr.f32.gmra.mrb[0].mxu0 %v556
  %v658 = vpop.f32.mrb[0].mxu0
  %v659 = vadd.f32 0.0, %v658
  %v660 = vpop.f32.mrb[0].mxu0
  %661 = vmatprep.mubr.f32.mxu0 0.0
  %662 = vmatmul.mubr.f32.gmra.mrb[0].mxu0 %v559
  %v663 = vpop.f32.mrb[0].mxu0
  %v664 = vadd.f32 0.0, %v663
  %v665 = vpop.f32.mrb[0].mxu0
  %666 = vmatprep.mubr.f32.mxu0 0.0
  %667 = vmatmul.mubr.f32.gmra.mrb[0].mxu0 %v562
  %v668 = vpop.f32.mrb[0].mxu0
  %v669 = vadd.f32 0.0, %v668
  %v670 = vpop.f32.mrb[0].mxu0
  %671 = vdwg.mxu0
  %v672 = vadd.f32 %v522, %v634
  %v673 = vadd.f32 %v523, %v639
  %v674 = vadd.f32 %v524, %v644
  %v675 = vadd.f32 %v525, %v649
  %v676 = vadd.f32 %v526, %v654
  %v677 = vadd.f32 %v527, %v659
  %v678 = vadd.f32 %v528, %v664
  %v679 = vadd.f32 %v529, %v669
  %v680 = vtanh.pop %v672
  %v681 = vtanh.pop %v673
  %v682 = vtanh.pop %v674
  %v683 = vtanh.pop %v675
  %v684 = vtanh.pop %v676
  %v685 = vtanh.pop %v677
  %v686 = vtanh.pop %v678
  %v687 = vtanh.pop %v679
  %688 = vst.msk [vmem:[#allocation2 + $0x8] sm:$0xff] %vm42, %v680
  %689 = vst.msk [vmem:[#allocation2 + $0x10] sm:$0xff] %vm42, %v681
  %690 = vst.msk [vmem:[#allocation2 + $0x18] sm:$0xff] %vm42, %v682
  %691 = vst.msk [vmem:[#allocation2 + $0x20] sm:$0xff] %vm42, %v683
  %692 = vst.msk [vmem:[#allocation2 + $0x38] sm:$0xff] %vm42, %v684
  %693 = vst.msk [vmem:[#allocation2 + $0x40] sm:$0xff] %vm42, %v685
  %694 = vst.msk [vmem:[#allocation2 + $0x48] sm:$0xff] %vm42, %v686
  %695 = vst.msk [vmem:[#allocation2 + $0x50] sm:$0xff] %vm42, %v687
  %v696 = vld [vmem:[%s4] sm:$0x1]
  %v698 = vlaneseq
  %v699 = vshrl.u32 %v698, 7
  %v700 = vsub.s32 0, %v699
  %v701 = vrot.slane %v696, %v700
  %v703 = vld [vmem:[#allocation2 + $0x7] sm:$0xff]
  %v704 = vld [vmem:[#allocation2 + $0xf] sm:$0xff]
  %v705 = vld [vmem:[#allocation2 + $0x17] sm:$0xff]
  %v706 = vld [vmem:[#allocation2 + $0x1f] sm:$0xff]
  %v707 = vld [vmem:[#allocation2 + $0x37] sm:$0xff]
  %v708 = vld [vmem:[#allocation2 + $0x3f] sm:$0xff]
  %v709 = vld [vmem:[#allocation2 + $0x47] sm:$0xff]
  %v710 = vld [vmem:[#allocation2 + $0x4f] sm:$0xff]
  %v711 = vld [vmem:[%s3] sm:$0xff]
  %v713 = vsel %vm42, %v703, 0
  %v716 = vsel %vm42, %v704, 0
  %v719 = vsel %vm42, %v705, 0
  %v722 = vsel %vm42, %v706, 0
  %v725 = vsel %vm42, %v707, 0
  %v728 = vsel %vm42, %v708, 0
  %v731 = vsel %vm42, %v709, 0
  %v734 = vsel %vm42, %v710, 0
  %736 = vmatprep.subr.mxu0 0.0
  %737 = vmatpush1.msra.mxu0 %v711
  %738 = vmatprep.subr.mxu0 0.0
  %739 = vmatpush1.msra.mxu0 0.0
  %740 = vmatprep.subr.mxu0 0.0
  %741 = vmatpush1.msra.mxu0 0.0
  %742 = vmatprep.subr.mxu0 0.0
  %743 = vmatpush1.msra.mxu0 0.0
  %744 = vmatprep.subr.mxu0 0.0
  %745 = vmatpush1.msra.mxu0 0.0
  %746 = vmatprep.subr.mxu0 0.0
  %747 = vmatpush1.msra.mxu0 0.0
  %748 = vmatprep.subr.mxu0 0.0
  %749 = vmatpush1.msra.mxu0 0.0
  %750 = vmatprep.subr.mxu0 0.0
  %751 = vmatpush1.msra.mxu0 0.0
  %752 = vmatprep.subr.mxu0 0.0
  %753 = vmatpush1.msra.mxu0 0.0
  %754 = vmatprep.subr.mxu0 0.0
  %755 = vmatpush1.msra.mxu0 0.0
  %756 = vmatprep.subr.mxu0 0.0
  %757 = vmatpush1.msra.mxu0 0.0
  %758 = vmatprep.subr.mxu0 0.0
  %759 = vmatpush1.msra.mxu0 0.0
  %760 = vmatprep.subr.mxu0 0.0
  %761 = vmatpush1.msra.mxu0 0.0
  %762 = vmatprep.subr.mxu0 0.0
  %763 = vmatpush1.msra.mxu0 0.0
  %764 = vmatprep.subr.mxu0 0.0
  %765 = vmatpush1.msra.mxu0 0.0
  %766 = vmatprep.subr.mxu0 0.0
  %767 = vmatpush1.msra.mxu0 0.0
  %768 = vmatprep.subr.mxu0 0.0
  %769 = vmatpush1.msra.mxu0 0.0
  %770 = vmatprep.subr.mxu0 0.0
  %771 = vmatpush1.msra.mxu0 0.0
  %772 = vmatprep.subr.mxu0 0.0
  %773 = vmatpush1.msra.mxu0 0.0
  %774 = vmatprep.subr.mxu0 0.0
  %775 = vmatpush1.msra.mxu0 0.0
  %776 = vmatprep.subr.mxu0 0.0
  %777 = vmatpush1.msra.mxu0 0.0
  %778 = vmatprep.subr.mxu0 0.0
  %779 = vmatpush1.msra.mxu0 0.0
  %780 = vmatprep.subr.mxu0 0.0
  %781 = vmatpush1.msra.mxu0 0.0
  %782 = vmatprep.subr.mxu0 0.0
  %783 = vmatpush1.msra.mxu0 0.0
  %784 = vmatprep.subr.mxu0 0.0
  %785 = vmatpush1.msra.mxu0 0.0
  %786 = vmatprep.subr.mxu0 0.0
  %787 = vmatpush1.msra.mxu0 0.0
  %788 = vmatprep.subr.mxu0 0.0
  %789 = vmatpush1.msra.mxu0 0.0
  %790 = vmatprep.subr.mxu0 0.0
  %791 = vmatpush1.msra.mxu0 0.0
  %792 = vmatprep.subr.mxu0 0.0
  %793 = vmatpush1.msra.mxu0 0.0
  %794 = vmatprep.subr.mxu0 0.0
  %795 = vmatpush1.msra.mxu0 0.0
  %796 = vmatprep.subr.mxu0 0.0
  %797 = vmatpush1.msra.mxu0 0.0
  %798 = vmatprep.subr.mxu0 0.0
  %799 = vmatpush1.msra.mxu0 0.0
  %800 = vmatprep.mubr.f32.mxu0 0.0
  %801 = vmatmul.mubr.f32.gmra.mrb[0].mxu0 %v713
  %v802 = vpop.f32.mrb[0].mxu0
  %v803 = vadd.f32 0.0, %v802
  %v804 = vpop.f32.mrb[0].mxu0
  %805 = vmatprep.mubr.f32.mxu0 0.0
  %806 = vmatmul.mubr.f32.gmra.mrb[0].mxu0 %v716
  %v807 = vpop.f32.mrb[0].mxu0
  %v808 = vadd.f32 0.0, %v807
  %v809 = vpop.f32.mrb[0].mxu0
  %810 = vmatprep.mubr.f32.mxu0 0.0
  %811 = vmatmul.mubr.f32.gmra.mrb[0].mxu0 %v719
  %v812 = vpop.f32.mrb[0].mxu0
  %v813 = vadd.f32 0.0, %v812
  %v814 = vpop.f32.mrb[0].mxu0
  %815 = vmatprep.mubr.f32.mxu0 0.0
  %816 = vmatmul.mubr.f32.gmra.mrb[0].mxu0 %v722
  %v817 = vpop.f32.mrb[0].mxu0
  %v818 = vadd.f32 0.0, %v817
  %v819 = vpop.f32.mrb[0].mxu0
  %820 = vmatprep.mubr.f32.mxu0 0.0
  %821 = vmatmul.mubr.f32.gmra.mrb[0].mxu0 %v725
  %v822 = vpop.f32.mrb[0].mxu0
  %v823 = vadd.f32 0.0, %v822
  %v824 = vpop.f32.mrb[0].mxu0
  %825 = vmatprep.mubr.f32.mxu0 0.0
  %826 = vmatmul.mubr.f32.gmra.mrb[0].mxu0 %v728
  %v827 = vpop.f32.mrb[0].mxu0
  %v828 = vadd.f32 0.0, %v827
  %v829 = vpop.f32.mrb[0].mxu0
  %830 = vmatprep.mubr.f32.mxu0 0.0
  %831 = vmatmul.mubr.f32.gmra.mrb[0].mxu0 %v731
  %v832 = vpop.f32.mrb[0].mxu0
  %v833 = vadd.f32 0.0, %v832
  %v834 = vpop.f32.mrb[0].mxu0
  %835 = vmatprep.mubr.f32.mxu0 0.0
  %836 = vmatmul.mubr.f32.gmra.mrb[0].mxu0 %v734
  %v837 = vpop.f32.mrb[0].mxu0
  %v838 = vadd.f32 0.0, %v837
  %v839 = vpop.f32.mrb[0].mxu0
  %840 = vdwg.mxu0
  %v841 = vadd.f32 %v701, %v803
  %v842 = vadd.f32 %v701, %v808
  %v843 = vadd.f32 %v701, %v813
  %v844 = vadd.f32 %v701, %v818
  %v845 = vadd.f32 %v701, %v823
  %v846 = vadd.f32 %v701, %v828
  %v847 = vadd.f32 %v701, %v833
  %v848 = vadd.f32 %v701, %v838
  %v849 = vld [vmem:[#allocation2 + $0x8] sm:$0xff]
  %v850 = vld [vmem:[#allocation2 + $0x10] sm:$0xff]
  %v851 = vld [vmem:[#allocation2 + $0x18] sm:$0xff]
  %v852 = vld [vmem:[#allocation2 + $0x20] sm:$0xff]
  %v853 = vld [vmem:[#allocation2 + $0x38] sm:$0xff]
  %v854 = vld [vmem:[#allocation2 + $0x40] sm:$0xff]
  %v855 = vld [vmem:[#allocation2 + $0x48] sm:$0xff]
  %v856 = vld [vmem:[#allocation2 + $0x50] sm:$0xff]
  %s857 = scalar_lea.vmem %s3, 8
  %v858 = vld [vmem:[%s857] sm:$0xff]
  %v860 = vsel %vm42, %v849, 0
  %v863 = vsel %vm42, %v850, 0
  %v866 = vsel %vm42, %v851, 0
  %v869 = vsel %vm42, %v852, 0
  %v872 = vsel %vm42, %v853, 0
  %v875 = vsel %vm42, %v854, 0
  %v878 = vsel %vm42, %v855, 0
  %v881 = vsel %vm42, %v856, 0
  %883 = vmatprep.subr.mxu0 0.0
  %884 = vmatpush1.msra.mxu0 %v858
  %885 = vmatprep.subr.mxu0 0.0
  %886 = vmatpush1.msra.mxu0 0.0
  %887 = vmatprep.subr.mxu0 0.0
  %888 = vmatpush1.msra.mxu0 0.0
  %889 = vmatprep.subr.mxu0 0.0
  %890 = vmatpush1.msra.mxu0 0.0
  %891 = vmatprep.subr.mxu0 0.0
  %892 = vmatpush1.msra.mxu0 0.0
  %893 = vmatprep.subr.mxu0 0.0
  %894 = vmatpush1.msra.mxu0 0.0
  %895 = vmatprep.subr.mxu0 0.0
  %896 = vmatpush1.msra.mxu0 0.0
  %897 = vmatprep.subr.mxu0 0.0
  %898 = vmatpush1.msra.mxu0 0.0
  %899 = vmatprep.subr.mxu0 0.0
  %900 = vmatpush1.msra.mxu0 0.0
  %901 = vmatprep.subr.mxu0 0.0
  %902 = vmatpush1.msra.mxu0 0.0
  %903 = vmatprep.subr.mxu0 0.0
  %904 = vmatpush1.msra.mxu0 0.0
  %905 = vmatprep.subr.mxu0 0.0
  %906 = vmatpush1.msra.mxu0 0.0
  %907 = vmatprep.subr.mxu0 0.0
  %908 = vmatpush1.msra.mxu0 0.0
  %909 = vmatprep.subr.mxu0 0.0
  %910 = vmatpush1.msra.mxu0 0.0
  %911 = vmatprep.subr.mxu0 0.0
  %912 = vmatpush1.msra.mxu0 0.0
  %913 = vmatprep.subr.mxu0 0.0
  %914 = vmatpush1.msra.mxu0 0.0
  %915 = vmatprep.subr.mxu0 0.0
  %916 = vmatpush1.msra.mxu0 0.0
  %917 = vmatprep.subr.mxu0 0.0
  %918 = vmatpush1.msra.mxu0 0.0
  %919 = vmatprep.subr.mxu0 0.0
  %920 = vmatpush1.msra.mxu0 0.0
  %921 = vmatprep.subr.mxu0 0.0
  %922 = vmatpush1.msra.mxu0 0.0
  %923 = vmatprep.subr.mxu0 0.0
  %924 = vmatpush1.msra.mxu0 0.0
  %925 = vmatprep.subr.mxu0 0.0
  %926 = vmatpush1.msra.mxu0 0.0
  %927 = vmatprep.subr.mxu0 0.0
  %928 = vmatpush1.msra.mxu0 0.0
  %929 = vmatprep.subr.mxu0 0.0
  %930 = vmatpush1.msra.mxu0 0.0
  %931 = vmatprep.subr.mxu0 0.0
  %932 = vmatpush1.msra.mxu0 0.0
  %933 = vmatprep.subr.mxu0 0.0
  %934 = vmatpush1.msra.mxu0 0.0
  %935 = vmatprep.subr.mxu0 0.0
  %936 = vmatpush1.msra.mxu0 0.0
  %937 = vmatprep.subr.mxu0 0.0
  %938 = vmatpush1.msra.mxu0 0.0
  %939 = vmatprep.subr.mxu0 0.0
  %940 = vmatpush1.msra.mxu0 0.0
  %941 = vmatprep.subr.mxu0 0.0
  %942 = vmatpush1.msra.mxu0 0.0
  %943 = vmatprep.subr.mxu0 0.0
  %944 = vmatpush1.msra.mxu0 0.0
  %945 = vmatprep.subr.mxu0 0.0
  %946 = vmatpush1.msra.mxu0 0.0
  %947 = vmatprep.mubr.f32.mxu0 0.0
  %948 = vmatmul.mubr.f32.gmra.mrb[0].mxu0 %v860
  %v949 = vpop.f32.mrb[0].mxu0
  %v950 = vadd.f32 0.0, %v949
  %v951 = vpop.f32.mrb[0].mxu0
  %952 = vmatprep.mubr.f32.mxu0 0.0
  %953 = vmatmul.mubr.f32.gmra.mrb[0].mxu0 %v863
  %v954 = vpop.f32.mrb[0].mxu0
  %v955 = vadd.f32 0.0, %v954
  %v956 = vpop.f32.mrb[0].mxu0
  %957 = vmatprep.mubr.f32.mxu0 0.0
  %958 = vmatmul.mubr.f32.gmra.mrb[0].mxu0 %v866
  %v959 = vpop.f32.mrb[0].mxu0
  %v960 = vadd.f32 0.0, %v959
  %v961 = vpop.f32.mrb[0].mxu0
  %962 = vmatprep.mubr.f32.mxu0 0.0
  %963 = vmatmul.mubr.f32.gmra.mrb[0].mxu0 %v869
  %v964 = vpop.f32.mrb[0].mxu0
  %v965 = vadd.f32 0.0, %v964
  %v966 = vpop.f32.mrb[0].mxu0
  %967 = vmatprep.mubr.f32.mxu0 0.0
  %968 = vmatmul.mubr.f32.gmra.mrb[0].mxu0 %v872
  %v969 = vpop.f32.mrb[0].mxu0
  %v970 = vadd.f32 0.0, %v969
  %v971 = vpop.f32.mrb[0].mxu0
  %972 = vmatprep.mubr.f32.mxu0 0.0
  %973 = vmatmul.mubr.f32.gmra.mrb[0].mxu0 %v875
  %v974 = vpop.f32.mrb[0].mxu0
  %v975 = vadd.f32 0.0, %v974
  %v976 = vpop.f32.mrb[0].mxu0
  %977 = vmatprep.mubr.f32.mxu0 0.0
  %978 = vmatmul.mubr.f32.gmra.mrb[0].mxu0 %v878
  %v979 = vpop.f32.mrb[0].mxu0
  %v980 = vadd.f32 0.0, %v979
  %v981 = vpop.f32.mrb[0].mxu0
  %982 = vmatprep.mubr.f32.mxu0 0.0
  %983 = vmatmul.mubr.f32.gmra.mrb[0].mxu0 %v881
  %v984 = vpop.f32.mrb[0].mxu0
  %v985 = vadd.f32 0.0, %v984
  %v986 = vpop.f32.mrb[0].mxu0
  %987 = vdwg.mxu0
  %v988 = vadd.f32 %v841, %v950
  %v989 = vadd.f32 %v842, %v955
  %v990 = vadd.f32 %v843, %v960
  %v991 = vadd.f32 %v844, %v965
  %v992 = vadd.f32 %v845, %v970
  %v993 = vadd.f32 %v846, %v975
  %v994 = vadd.f32 %v847, %v980
  %v995 = vadd.f32 %v848, %v985
  %v996 = vld [vmem:[#allocation2 + $0x9] sm:$0xff]
  %v997 = vld [vmem:[#allocation2 + $0x11] sm:$0xff]
  %v998 = vld [vmem:[#allocation2 + $0x19] sm:$0xff]
  %v999 = vld [vmem:[#allocation2 + $0x21] sm:$0xff]
  %v1000 = vld [vmem:[#allocation2 + $0x39] sm:$0xff]
  %v1001 = vld [vmem:[#allocation2 + $0x41] sm:$0xff]
  %v1002 = vld [vmem:[#allocation2 + $0x49] sm:$0xff]
  %v1003 = vld [vmem:[#allocation2 + $0x51] sm:$0xff]
  %s1004 = scalar_lea.vmem %s3, 16
  %v1005 = vld [vmem:[%s1004] sm:$0xff]
  %v1007 = vsel %vm42, %v996, 0
  %v1010 = vsel %vm42, %v997, 0
  %v1013 = vsel %vm42, %v998, 0
  %v1016 = vsel %vm42, %v999, 0
  %v1019 = vsel %vm42, %v1000, 0
  %v1022 = vsel %vm42, %v1001, 0
  %v1025 = vsel %vm42, %v1002, 0
  %v1028 = vsel %vm42, %v1003, 0
  %1030 = vmatprep.subr.mxu0 0.0
  %1031 = vmatpush1.msra.mxu0 %v1005
  %1032 = vmatprep.subr.mxu0 0.0
  %1033 = vmatpush1.msra.mxu0 0.0
  %1034 = vmatprep.subr.mxu0 0.0
  %1035 = vmatpush1.msra.mxu0 0.0
  %1036 = vmatprep.subr.mxu0 0.0
  %1037 = vmatpush1.msra.mxu0 0.0
  %1038 = vmatprep.subr.mxu0 0.0
  %1039 = vmatpush1.msra.mxu0 0.0
  %1040 = vmatprep.subr.mxu0 0.0
  %1041 = vmatpush1.msra.mxu0 0.0
  %1042 = vmatprep.subr.mxu0 0.0
  %1043 = vmatpush1.msra.mxu0 0.0
  %1044 = vmatprep.subr.mxu0 0.0
  %1045 = vmatpush1.msra.mxu0 0.0
  %1046 = vmatprep.subr.mxu0 0.0
  %1047 = vmatpush1.msra.mxu0 0.0
  %1048 = vmatprep.subr.mxu0 0.0
  %1049 = vmatpush1.msra.mxu0 0.0
  %1050 = vmatprep.subr.mxu0 0.0
  %1051 = vmatpush1.msra.mxu0 0.0
  %1052 = vmatprep.subr.mxu0 0.0
  %1053 = vmatpush1.msra.mxu0 0.0
  %1054 = vmatprep.subr.mxu0 0.0
  %1055 = vmatpush1.msra.mxu0 0.0
  %1056 = vmatprep.subr.mxu0 0.0
  %1057 = vmatpush1.msra.mxu0 0.0
  %1058 = vmatprep.subr.mxu0 0.0
  %1059 = vmatpush1.msra.mxu0 0.0
  %1060 = vmatprep.subr.mxu0 0.0
  %1061 = vmatpush1.msra.mxu0 0.0
  %1062 = vmatprep.subr.mxu0 0.0
  %1063 = vmatpush1.msra.mxu0 0.0
  %1064 = vmatprep.subr.mxu0 0.0
  %1065 = vmatpush1.msra.mxu0 0.0
  %1066 = vmatprep.subr.mxu0 0.0
  %1067 = vmatpush1.msra.mxu0 0.0
  %1068 = vmatprep.subr.mxu0 0.0
  %1069 = vmatpush1.msra.mxu0 0.0
  %1070 = vmatprep.subr.mxu0 0.0
  %1071 = vmatpush1.msra.mxu0 0.0
  %1072 = vmatprep.subr.mxu0 0.0
  %1073 = vmatpush1.msra.mxu0 0.0
  %1074 = vmatprep.subr.mxu0 0.0
  %1075 = vmatpush1.msra.mxu0 0.0
  %1076 = vmatprep.subr.mxu0 0.0
  %1077 = vmatpush1.msra.mxu0 0.0
  %1078 = vmatprep.subr.mxu0 0.0
  %1079 = vmatpush1.msra.mxu0 0.0
  %1080 = vmatprep.subr.mxu0 0.0
  %1081 = vmatpush1.msra.mxu0 0.0
  %1082 = vmatprep.subr.mxu0 0.0
  %1083 = vmatpush1.msra.mxu0 0.0
  %1084 = vmatprep.subr.mxu0 0.0
  %1085 = vmatpush1.msra.mxu0 0.0
  %1086 = vmatprep.subr.mxu0 0.0
  %1087 = vmatpush1.msra.mxu0 0.0
  %1088 = vmatprep.subr.mxu0 0.0
  %1089 = vmatpush1.msra.mxu0 0.0
  %1090 = vmatprep.subr.mxu0 0.0
  %1091 = vmatpush1.msra.mxu0 0.0
  %1092 = vmatprep.subr.mxu0 0.0
  %1093 = vmatpush1.msra.mxu0 0.0
  %1094 = vmatprep.mubr.f32.mxu0 0.0
  %1095 = vmatmul.mubr.f32.gmra.mrb[0].mxu0 %v1007
  %v1096 = vpop.f32.mrb[0].mxu0
  %v1097 = vadd.f32 0.0, %v1096
  %v1098 = vpop.f32.mrb[0].mxu0
  %1099 = vmatprep.mubr.f32.mxu0 0.0
  %1100 = vmatmul.mubr.f32.gmra.mrb[0].mxu0 %v1010
  %v1101 = vpop.f32.mrb[0].mxu0
  %v1102 = vadd.f32 0.0, %v1101
  %v1103 = vpop.f32.mrb[0].mxu0
  %1104 = vmatprep.mubr.f32.mxu0 0.0
  %1105 = vmatmul.mubr.f32.gmra.mrb[0].mxu0 %v1013
  %v1106 = vpop.f32.mrb[0].mxu0
  %v1107 = vadd.f32 0.0, %v1106
  %v1108 = vpop.f32.mrb[0].mxu0
  %1109 = vmatprep.mubr.f32.mxu0 0.0
  %1110 = vmatmul.mubr.f32.gmra.mrb[0].mxu0 %v1016
  %v1111 = vpop.f32.mrb[0].mxu0
  %v1112 = vadd.f32 0.0, %v1111
  %v1113 = vpop.f32.mrb[0].mxu0
  %1114 = vmatprep.mubr.f32.mxu0 0.0
  %1115 = vmatmul.mubr.f32.gmra.mrb[0].mxu0 %v1019
  %v1116 = vpop.f32.mrb[0].mxu0
  %v1117 = vadd.f32 0.0, %v1116
  %v1118 = vpop.f32.mrb[0].mxu0
  %1119 = vmatprep.mubr.f32.mxu0 0.0
  %1120 = vmatmul.mubr.f32.gmra.mrb[0].mxu0 %v1022
  %v1121 = vpop.f32.mrb[0].mxu0
  %v1122 = vadd.f32 0.0, %v1121
  %v1123 = vpop.f32.mrb[0].mxu0
  %1124 = vmatprep.mubr.f32.mxu0 0.0
  %1125 = vmatmul.mubr.f32.gmra.mrb[0].mxu0 %v1025
  %v1126 = vpop.f32.mrb[0].mxu0
  %v1127 = vadd.f32 0.0, %v1126
  %v1128 = vpop.f32.mrb[0].mxu0
  %1129 = vmatprep.mubr.f32.mxu0 0.0
  %1130 = vmatmul.mubr.f32.gmra.mrb[0].mxu0 %v1028
  %v1131 = vpop.f32.mrb[0].mxu0
  %v1132 = vadd.f32 0.0, %v1131
  %v1133 = vpop.f32.mrb[0].mxu0
  %1134 = vdwg.mxu0
  %v1135 = vadd.f32 %v988, %v1097
  %v1136 = vadd.f32 %v989, %v1102
  %v1137 = vadd.f32 %v990, %v1107
  %v1138 = vadd.f32 %v991, %v1112
  %v1139 = vadd.f32 %v992, %v1117
  %v1140 = vadd.f32 %v993, %v1122
  %v1141 = vadd.f32 %v994, %v1127
  %v1142 = vadd.f32 %v995, %v1132
  %v1143 = vld [vmem:[#allocation2 + $0xa] sm:$0xff]
  %v1144 = vld [vmem:[#allocation2 + $0x12] sm:$0xff]
  %v1145 = vld [vmem:[#allocation2 + $0x1a] sm:$0xff]
  %v1146 = vld [vmem:[#allocation2 + $0x22] sm:$0xff]
  %v1147 = vld [vmem:[#allocation2 + $0x3a] sm:$0xff]
  %v1148 = vld [vmem:[#allocation2 + $0x42] sm:$0xff]
  %v1149 = vld [vmem:[#allocation2 + $0x4a] sm:$0xff]
  %v1150 = vld [vmem:[#allocation2 + $0x52] sm:$0xff]
  %s1151 = scalar_lea.vmem %s3, 24
  %v1152 = vld [vmem:[%s1151] sm:$0xff]
  %v1154 = vsel %vm42, %v1143, 0
  %v1157 = vsel %vm42, %v1144, 0
  %v1160 = vsel %vm42, %v1145, 0
  %v1163 = vsel %vm42, %v1146, 0
  %v1166 = vsel %vm42, %v1147, 0
  %v1169 = vsel %vm42, %v1148, 0
  %v1172 = vsel %vm42, %v1149, 0
  %v1175 = vsel %vm42, %v1150, 0
  %1177 = vmatprep.subr.mxu0 0.0
  %1178 = vmatpush1.msra.mxu0 %v1152
  %1179 = vmatprep.subr.mxu0 0.0
  %1180 = vmatpush1.msra.mxu0 0.0
  %1181 = vmatprep.subr.mxu0 0.0
  %1182 = vmatpush1.msra.mxu0 0.0
  %1183 = vmatprep.subr.mxu0 0.0
  %1184 = vmatpush1.msra.mxu0 0.0
  %1185 = vmatprep.subr.mxu0 0.0
  %1186 = vmatpush1.msra.mxu0 0.0
  %1187 = vmatprep.subr.mxu0 0.0
  %1188 = vmatpush1.msra.mxu0 0.0
  %1189 = vmatprep.subr.mxu0 0.0
  %1190 = vmatpush1.msra.mxu0 0.0
  %1191 = vmatprep.subr.mxu0 0.0
  %1192 = vmatpush1.msra.mxu0 0.0
  %1193 = vmatprep.subr.mxu0 0.0
  %1194 = vmatpush1.msra.mxu0 0.0
  %1195 = vmatprep.subr.mxu0 0.0
  %1196 = vmatpush1.msra.mxu0 0.0
  %1197 = vmatprep.subr.mxu0 0.0
  %1198 = vmatpush1.msra.mxu0 0.0
  %1199 = vmatprep.subr.mxu0 0.0
  %1200 = vmatpush1.msra.mxu0 0.0
  %1201 = vmatprep.subr.mxu0 0.0
  %1202 = vmatpush1.msra.mxu0 0.0
  %1203 = vmatprep.subr.mxu0 0.0
  %1204 = vmatpush1.msra.mxu0 0.0
  %1205 = vmatprep.subr.mxu0 0.0
  %1206 = vmatpush1.msra.mxu0 0.0
  %1207 = vmatprep.subr.mxu0 0.0
  %1208 = vmatpush1.msra.mxu0 0.0
  %1209 = vmatprep.subr.mxu0 0.0
  %1210 = vmatpush1.msra.mxu0 0.0
  %1211 = vmatprep.subr.mxu0 0.0
  %1212 = vmatpush1.msra.mxu0 0.0
  %1213 = vmatprep.subr.mxu0 0.0
  %1214 = vmatpush1.msra.mxu0 0.0
  %1215 = vmatprep.subr.mxu0 0.0
  %1216 = vmatpush1.msra.mxu0 0.0
  %1217 = vmatprep.subr.mxu0 0.0
  %1218 = vmatpush1.msra.mxu0 0.0
  %1219 = vmatprep.subr.mxu0 0.0
  %1220 = vmatpush1.msra.mxu0 0.0
  %1221 = vmatprep.subr.mxu0 0.0
  %1222 = vmatpush1.msra.mxu0 0.0
  %1223 = vmatprep.subr.mxu0 0.0
  %1224 = vmatpush1.msra.mxu0 0.0
  %1225 = vmatprep.subr.mxu0 0.0
  %1226 = vmatpush1.msra.mxu0 0.0
  %1227 = vmatprep.subr.mxu0 0.0
  %1228 = vmatpush1.msra.mxu0 0.0
  %1229 = vmatprep.subr.mxu0 0.0
  %1230 = vmatpush1.msra.mxu0 0.0
  %1231 = vmatprep.subr.mxu0 0.0
  %1232 = vmatpush1.msra.mxu0 0.0
  %1233 = vmatprep.subr.mxu0 0.0
  %1234 = vmatpush1.msra.mxu0 0.0
  %1235 = vmatprep.subr.mxu0 0.0
  %1236 = vmatpush1.msra.mxu0 0.0
  %1237 = vmatprep.subr.mxu0 0.0
  %1238 = vmatpush1.msra.mxu0 0.0
  %1239 = vmatprep.subr.mxu0 0.0
  %1240 = vmatpush1.msra.mxu0 0.0
  %1241 = vmatprep.mubr.f32.mxu0 0.0
  %1242 = vmatmul.mubr.f32.gmra.mrb[0].mxu0 %v1154
  %v1243 = vpop.f32.mrb[0].mxu0
  %v1244 = vadd.f32 0.0, %v1243
  %v1245 = vpop.f32.mrb[0].mxu0
  %1246 = vmatprep.mubr.f32.mxu0 0.0
  %1247 = vmatmul.mubr.f32.gmra.mrb[0].mxu0 %v1157
  %v1248 = vpop.f32.mrb[0].mxu0
  %v1249 = vadd.f32 0.0, %v1248
  %v1250 = vpop.f32.mrb[0].mxu0
  %1251 = vmatprep.mubr.f32.mxu0 0.0
  %1252 = vmatmul.mubr.f32.gmra.mrb[0].mxu0 %v1160
  %v1253 = vpop.f32.mrb[0].mxu0
  %v1254 = vadd.f32 0.0, %v1253
  %v1255 = vpop.f32.mrb[0].mxu0
  %1256 = vmatprep.mubr.f32.mxu0 0.0
  %1257 = vmatmul.mubr.f32.gmra.mrb[0].mxu0 %v1163
  %v1258 = vpop.f32.mrb[0].mxu0
  %v1259 = vadd.f32 0.0, %v1258
  %v1260 = vpop.f32.mrb[0].mxu0
  %1261 = vmatprep.mubr.f32.mxu0 0.0
  %1262 = vmatmul.mubr.f32.gmra.mrb[0].mxu0 %v1166
  %v1263 = vpop.f32.mrb[0].mxu0
  %v1264 = vadd.f32 0.0, %v1263
  %v1265 = vpop.f32.mrb[0].mxu0
  %1266 = vmatprep.mubr.f32.mxu0 0.0
  %1267 = vmatmul.mubr.f32.gmra.mrb[0].mxu0 %v1169
  %v1268 = vpop.f32.mrb[0].mxu0
  %v1269 = vadd.f32 0.0, %v1268
  %v1270 = vpop.f32.mrb[0].mxu0
  %1271 = vmatprep.mubr.f32.mxu0 0.0
  %1272 = vmatmul.mubr.f32.gmra.mrb[0].mxu0 %v1172
  %v1273 = vpop.f32.mrb[0].mxu0
  %v1274 = vadd.f32 0.0, %v1273
  %v1275 = vpop.f32.mrb[0].mxu0
  %1276 = vmatprep.mubr.f32.mxu0 0.0
  %1277 = vmatmul.mubr.f32.gmra.mrb[0].mxu0 %v1175
  %v1278 = vpop.f32.mrb[0].mxu0
  %v1279 = vadd.f32 0.0, %v1278
  %v1280 = vpop.f32.mrb[0].mxu0
  %1281 = vdwg.mxu0
  %v1282 = vadd.f32 %v1135, %v1244
  %v1283 = vadd.f32 %v1136, %v1249
  %v1284 = vadd.f32 %v1137, %v1254
  %v1285 = vadd.f32 %v1138, %v1259
  %v1286 = vadd.f32 %v1139, %v1264
  %v1287 = vadd.f32 %v1140, %v1269
  %v1288 = vadd.f32 %v1141, %v1274
  %v1289 = vadd.f32 %v1142, %v1279
  %v1290 = vtanh.pop %v1282
  %v1291 = vtanh.pop %v1283
  %v1292 = vtanh.pop %v1284
  %v1293 = vtanh.pop %v1285
  %v1294 = vtanh.pop %v1286
  %v1295 = vtanh.pop %v1287
  %v1296 = vtanh.pop %v1288
  %v1297 = vtanh.pop %v1289
  %1298 = vst.msk [vmem:[#allocation2 + $0x8] sm:$0xff] %vm42, %v1290
  %1299 = vst.msk [vmem:[#allocation2 + $0x10] sm:$0xff] %vm42, %v1291
  %1300 = vst.msk [vmem:[#allocation2 + $0x18] sm:$0xff] %vm42, %v1292
  %1301 = vst.msk [vmem:[#allocation2 + $0x20] sm:$0xff] %vm42, %v1293
  %1302 = vst.msk [vmem:[#allocation2 + $0x38] sm:$0xff] %vm42, %v1294
  %1303 = vst.msk [vmem:[#allocation2 + $0x40] sm:$0xff] %vm42, %v1295
  %1304 = vst.msk [vmem:[#allocation2 + $0x48] sm:$0xff] %vm42, %v1296
  %1305 = vst.msk [vmem:[#allocation2 + $0x50] sm:$0xff] %vm42, %v1297
  %v1306 = vld [vmem:[#allocation3] sm:$0x1]
  %v1308 = vlaneseq
  %v1309 = vshrl.u32 %v1308, 7
  %v1310 = vsub.s32 0, %v1309
  %v1311 = vrot.slane %v1306, %v1310
  %1312 = vset.pattern.permute.xlu0 0
  %1313 = vperm.xlu0 %1312, %v1311
  %v1314 = vpop.permute.xlu0 %1313
  %v1316 = vld [vmem:[#allocation2 + $0x7] sm:$0xff]
  %v1317 = vld [vmem:[#allocation2 + $0xf] sm:$0xff]
  %v1318 = vld [vmem:[#allocation2 + $0x17] sm:$0xff]
  %v1319 = vld [vmem:[#allocation2 + $0x1f] sm:$0xff]
  %v1320 = vld [vmem:[#allocation2 + $0x37] sm:$0xff]
  %v1321 = vld [vmem:[#allocation2 + $0x3f] sm:$0xff]
  %v1322 = vld [vmem:[#allocation2 + $0x47] sm:$0xff]
  %v1323 = vld [vmem:[#allocation2 + $0x4f] sm:$0xff]
  %v1324 = vld [vmem:[%s5] sm:$0x1]
  %v1326 = vlaneseq
  %v1327 = vshrl.u32 %v1326, 7
  %v1328 = vsub.s32 0, %v1327
  %v1329 = vrot.slane %v1324, %v1328
  %v1331 = vmul.f32 %v1316, %v1329
  %v1332 = vmul.f32 %v1317, %v1329
  %v1333 = vmul.f32 %v1318, %v1329
  %v1334 = vmul.f32 %v1319, %v1329
  %v1335 = vmul.f32 %v1320, %v1329
  %v1336 = vmul.f32 %v1321, %v1329
  %v1337 = vmul.f32 %v1322, %v1329
  %v1338 = vmul.f32 %v1323, %v1329
  %v1339 = vsel %vm42, %v1331, 0.0
  %1340 = vadd.xlane.f32.xlu0 %v1339
  %v1341 = vpop.xlane.xlu0 %1340
  %v1342 = vsel %vm42, %v1332, 0.0
  %1343 = vadd.xlane.f32.xlu0 %v1342
  %v1344 = vpop.xlane.xlu0 %1343
  %v1345 = vsel %vm42, %v1333, 0.0
  %1346 = vadd.xlane.f32.xlu0 %v1345
  %v1347 = vpop.xlane.xlu0 %1346
  %v1348 = vsel %vm42, %v1334, 0.0
  %1349 = vadd.xlane.f32.xlu0 %v1348
  %v1350 = vpop.xlane.xlu0 %1349
  %v1351 = vsel %vm42, %v1335, 0.0
  %1352 = vadd.xlane.f32.xlu0 %v1351
  %v1353 = vpop.xlane.xlu0 %1352
  %v1354 = vsel %vm42, %v1336, 0.0
  %1355 = vadd.xlane.f32.xlu0 %v1354
  %v1356 = vpop.xlane.xlu0 %1355
  %v1357 = vsel %vm42, %v1337, 0.0
  %1358 = vadd.xlane.f32.xlu0 %v1357
  %v1359 = vpop.xlane.xlu0 %1358
  %v1360 = vsel %vm42, %v1338, 0.0
  %1361 = vadd.xlane.f32.xlu0 %v1360
  %v1362 = vpop.xlane.xlu0 %1361
  %v1363 = vadd.f32 %v1314, %v1341
  %v1364 = vadd.f32 %v1314, %v1344
  %v1365 = vadd.f32 %v1314, %v1347
  %v1366 = vadd.f32 %v1314, %v1350
  %v1367 = vadd.f32 %v1314, %v1353
  %v1368 = vadd.f32 %v1314, %v1356
  %v1369 = vadd.f32 %v1314, %v1359
  %v1370 = vadd.f32 %v1314, %v1362
  %v1371 = vld [vmem:[#allocation2 + $0x8] sm:$0xff]
  %v1372 = vld [vmem:[#allocation2 + $0x10] sm:$0xff]
  %v1373 = vld [vmem:[#allocation2 + $0x18] sm:$0xff]
  %v1374 = vld [vmem:[#allocation2 + $0x20] sm:$0xff]
  %v1375 = vld [vmem:[#allocation2 + $0x38] sm:$0xff]
  %v1376 = vld [vmem:[#allocation2 + $0x40] sm:$0xff]
  %v1377 = vld [vmem:[#allocation2 + $0x48] sm:$0xff]
  %v1378 = vld [vmem:[#allocation2 + $0x50] sm:$0xff]
  %s1379 = scalar_lea.vmem %s5, 1
  %v1380 = vld [vmem:[%s1379] sm:$0x1]
  %v1382 = vlaneseq
  %v1383 = vshrl.u32 %v1382, 7
  %v1384 = vsub.s32 0, %v1383
  %v1385 = vrot.slane %v1380, %v1384
  %v1387 = vmul.f32 %v1371, %v1385
  %v1388 = vmul.f32 %v1372, %v1385
  %v1389 = vmul.f32 %v1373, %v1385
  %v1390 = vmul.f32 %v1374, %v1385
  %v1391 = vmul.f32 %v1375, %v1385
  %v1392 = vmul.f32 %v1376, %v1385
  %v1393 = vmul.f32 %v1377, %v1385
  %v1394 = vmul.f32 %v1378, %v1385
  %v1395 = vsel %vm42, %v1387, 0.0
  %1396 = vadd.xlane.f32.xlu0 %v1395
  %v1397 = vpop.xlane.xlu0 %1396
  %v1398 = vsel %vm42, %v1388, 0.0
  %1399 = vadd.xlane.f32.xlu0 %v1398
  %v1400 = vpop.xlane.xlu0 %1399
  %v1401 = vsel %vm42, %v1389, 0.0
  %1402 = vadd.xlane.f32.xlu0 %v1401
  %v1403 = vpop.xlane.xlu0 %1402
  %v1404 = vsel %vm42, %v1390, 0.0
  %1405 = vadd.xlane.f32.xlu0 %v1404
  %v1406 = vpop.xlane.xlu0 %1405
  %v1407 = vsel %vm42, %v1391, 0.0
  %1408 = vadd.xlane.f32.xlu0 %v1407
  %v1409 = vpop.xlane.xlu0 %1408
  %v1410 = vsel %vm42, %v1392, 0.0
  %1411 = vadd.xlane.f32.xlu0 %v1410
  %v1412 = vpop.xlane.xlu0 %1411
  %v1413 = vsel %vm42, %v1393, 0.0
  %1414 = vadd.xlane.f32.xlu0 %v1413
  %v1415 = vpop.xlane.xlu0 %1414
  %v1416 = vsel %vm42, %v1394, 0.0
  %1417 = vadd.xlane.f32.xlu0 %v1416
  %v1418 = vpop.xlane.xlu0 %1417
  %v1419 = vadd.f32 %v1363, %v1397
  %v1420 = vadd.f32 %v1364, %v1400
  %v1421 = vadd.f32 %v1365, %v1403
  %v1422 = vadd.f32 %v1366, %v1406
  %v1423 = vadd.f32 %v1367, %v1409
  %v1424 = vadd.f32 %v1368, %v1412
  %v1425 = vadd.f32 %v1369, %v1415
  %v1426 = vadd.f32 %v1370, %v1418
  %v1427 = vld [vmem:[#allocation2 + $0x9] sm:$0xff]
  %v1428 = vld [vmem:[#allocation2 + $0x11] sm:$0xff]
  %v1429 = vld [vmem:[#allocation2 + $0x19] sm:$0xff]
  %v1430 = vld [vmem:[#allocation2 + $0x21] sm:$0xff]
  %v1431 = vld [vmem:[#allocation2 + $0x39] sm:$0xff]
  %v1432 = vld [vmem:[#allocation2 + $0x41] sm:$0xff]
  %v1433 = vld [vmem:[#allocation2 + $0x49] sm:$0xff]
  %v1434 = vld [vmem:[#allocation2 + $0x51] sm:$0xff]
  %s1435 = scalar_lea.vmem %s5, 2
  %v1436 = vld [vmem:[%s1435] sm:$0x1]
  %v1438 = vlaneseq
  %v1439 = vshrl.u32 %v1438, 7
  %v1440 = vsub.s32 0, %v1439
  %v1441 = vrot.slane %v1436, %v1440
  %v1443 = vmul.f32 %v1427, %v1441
  %v1444 = vmul.f32 %v1428, %v1441
  %v1445 = vmul.f32 %v1429, %v1441
  %v1446 = vmul.f32 %v1430, %v1441
  %v1447 = vmul.f32 %v1431, %v1441
  %v1448 = vmul.f32 %v1432, %v1441
  %v1449 = vmul.f32 %v1433, %v1441
  %v1450 = vmul.f32 %v1434, %v1441
  %v1451 = vsel %vm42, %v1443, 0.0
  %1452 = vadd.xlane.f32.xlu0 %v1451
  %v1453 = vpop.xlane.xlu0 %1452
  %v1454 = vsel %vm42, %v1444, 0.0
  %1455 = vadd.xlane.f32.xlu0 %v1454
  %v1456 = vpop.xlane.xlu0 %1455
  %v1457 = vsel %vm42, %v1445, 0.0
  %1458 = vadd.xlane.f32.xlu0 %v1457
  %v1459 = vpop.xlane.xlu0 %1458
  %v1460 = vsel %vm42, %v1446, 0.0
  %1461 = vadd.xlane.f32.xlu0 %v1460
  %v1462 = vpop.xlane.xlu0 %1461
  %v1463 = vsel %vm42, %v1447, 0.0
  %1464 = vadd.xlane.f32.xlu0 %v1463
  %v1465 = vpop.xlane.xlu0 %1464
  %v1466 = vsel %vm42, %v1448, 0.0
  %1467 = vadd.xlane.f32.xlu0 %v1466
  %v1468 = vpop.xlane.xlu0 %1467
  %v1469 = vsel %vm42, %v1449, 0.0
  %1470 = vadd.xlane.f32.xlu0 %v1469
  %v1471 = vpop.xlane.xlu0 %1470
  %v1472 = vsel %vm42, %v1450, 0.0
  %1473 = vadd.xlane.f32.xlu0 %v1472
  %v1474 = vpop.xlane.xlu0 %1473
  %v1475 = vadd.f32 %v1419, %v1453
  %v1476 = vadd.f32 %v1420, %v1456
  %v1477 = vadd.f32 %v1421, %v1459
  %v1478 = vadd.f32 %v1422, %v1462
  %v1479 = vadd.f32 %v1423, %v1465
  %v1480 = vadd.f32 %v1424, %v1468
  %v1481 = vadd.f32 %v1425, %v1471
  %v1482 = vadd.f32 %v1426, %v1474
  %v1483 = vtanh.pop %v1475
  %v1484 = vtanh.pop %v1476
  %v1485 = vtanh.pop %v1477
  %v1486 = vtanh.pop %v1478
  %v1487 = vtanh.pop %v1479
  %v1488 = vtanh.pop %v1480
  %v1489 = vtanh.pop %v1481
  %v1490 = vtanh.pop %v1482
  %v1491 = vld [vmem:[%s7] sm:$0xff]
  %v1492 = vld [vmem:[%s7 + $0x8] sm:$0xff]
  %v1493 = vld [vmem:[%s7 + $0x10] sm:$0xff]
  %v1494 = vld [vmem:[%s7 + $0x18] sm:$0xff]
  %v1495 = vld [vmem:[%s8] sm:$0x1]
  %v1497 = vlaneseq
  %v1498 = vshrl.u32 %v1497, 7
  %v1499 = vsub.s32 0, %v1498
  %v1500 = vrot.slane %v1495, %v1499
  %v1510 = vlaneseq
  %v1511 = vand.u32 %v1510, 127
  %v1512 = vlaneseq
  %v1513 = vshrl.u32 %v1512, 7
  %v1514 = vsub.s32 %v1511, %v1513
  %v1515 = vrot.slane %v1483, %v1514
  %v1516 = vadd.s32 %v1511, 4294967288
  %v1517 = vlaneseq
  %v1518 = vshrl.u32 %v1517, 7
  %v1519 = vsub.s32 %v1516, %v1518
  %v1520 = vrot.slane %v1484, %v1519
  %vm1521 = vcmask 130112
  %v1522 = vsel %vm1521, %v1520, %v1515
  %v1523 = vadd.s32 %v1511, 4294967280
  %v1524 = vlaneseq
  %v1525 = vshrl.u32 %v1524, 7
  %v1526 = vsub.s32 %v1523, %v1525
  %v1527 = vrot.slane %v1485, %v1526
  %vm1528 = vcmask 195712
  %v1529 = vsel %vm1528, %v1527, %v1522
  %v1530 = vadd.s32 %v1511, 4294967272
  %v1531 = vlaneseq
  %v1532 = vshrl.u32 %v1531, 7
  %v1533 = vsub.s32 %v1530, %v1532
  %v1534 = vrot.slane %v1486, %v1533
  %vm1535 = vcmask 261312
  %v1536 = vsel %vm1535, %v1534, %v1529
  %v1537 = vlaneseq
  %v1538 = vshrl.u32 %v1537, 7
  %v1539 = vsub.s32 %v1511, %v1538
  %v1540 = vrot.slane %v1487, %v1539
  %v1541 = vlaneseq
  %v1542 = vshrl.u32 %v1541, 7
  %v1543 = vsub.s32 %v1516, %v1542
  %v1544 = vrot.slane %v1488, %v1543
  %v1545 = vsel %vm1521, %v1544, %v1540
  %v1546 = vlaneseq
  %v1547 = vshrl.u32 %v1546, 7
  %v1548 = vsub.s32 %v1523, %v1547
  %v1549 = vrot.slane %v1489, %v1548
  %v1550 = vsel %vm1528, %v1549, %v1545
  %v1551 = vlaneseq
  %v1552 = vshrl.u32 %v1551, 7
  %v1553 = vsub.s32 %v1530, %v1552
  %v1554 = vrot.slane %v1490, %v1553
  %v1555 = vsel %vm1535, %v1554, %v1550
  %vm1556 = vcmask 1041409
  %v1557 = vsel %vm1556, %v1555, %v1536
  %vm1558 = vcmask 261120
  %v1559 = vsel %vm1558, %v1557, 0
  %1561 = vmatprep.subr.mxu0 0.0
  %1562 = vmatpush1.msra.mxu0 %v1491
  %1563 = vmatprep.subr.mxu0 0.0
  %1564 = vmatpush1.msra.mxu0 %v1492
  %1565 = vmatprep.subr.mxu0 0.0
  %1566 = vmatpush1.msra.mxu0 %v1493
  %1567 = vmatprep.subr.mxu0 0.0
  %1568 = vmatpush1.msra.mxu0 %v1494
  %1569 = vmatprep.subr.mxu0 0.0
  %1570 = vmatpush1.msra.mxu0 0.0
  %1571 = vmatprep.subr.mxu0 0.0
  %1572 = vmatpush1.msra.mxu0 0.0
  %1573 = vmatprep.subr.mxu0 0.0
  %1574 = vmatpush1.msra.mxu0 0.0
  %1575 = vmatprep.subr.mxu0 0.0
  %1576 = vmatpush1.msra.mxu0 0.0
  %1577 = vmatprep.subr.mxu0 0.0
  %1578 = vmatpush1.msra.mxu0 0.0
  %1579 = vmatprep.subr.mxu0 0.0
  %1580 = vmatpush1.msra.mxu0 0.0
  %1581 = vmatprep.subr.mxu0 0.0
  %1582 = vmatpush1.msra.mxu0 0.0
  %1583 = vmatprep.subr.mxu0 0.0
  %1584 = vmatpush1.msra.mxu0 0.0
  %1585 = vmatprep.subr.mxu0 0.0
  %1586 = vmatpush1.msra.mxu0 0.0
  %1587 = vmatprep.subr.mxu0 0.0
  %1588 = vmatpush1.msra.mxu0 0.0
  %1589 = vmatprep.subr.mxu0 0.0
  %1590 = vmatpush1.msra.mxu0 0.0
  %1591 = vmatprep.subr.mxu0 0.0
  %1592 = vmatpush1.msra.mxu0 0.0
  %1593 = vmatprep.subr.mxu0 0.0
  %1594 = vmatpush1.msra.mxu0 0.0
  %1595 = vmatprep.subr.mxu0 0.0
  %1596 = vmatpush1.msra.mxu0 0.0
  %1597 = vmatprep.subr.mxu0 0.0
  %1598 = vmatpush1.msra.mxu0 0.0
  %1599 = vmatprep.subr.mxu0 0.0
  %1600 = vmatpush1.msra.mxu0 0.0
  %1601 = vmatprep.subr.mxu0 0.0
  %1602 = vmatpush1.msra.mxu0 0.0
  %1603 = vmatprep.subr.mxu0 0.0
  %1604 = vmatpush1.msra.mxu0 0.0
  %1605 = vmatprep.subr.mxu0 0.0
  %1606 = vmatpush1.msra.mxu0 0.0
  %1607 = vmatprep.subr.mxu0 0.0
  %1608 = vmatpush1.msra.mxu0 0.0
  %1609 = vmatprep.subr.mxu0 0.0
  %1610 = vmatpush1.msra.mxu0 0.0
  %1611 = vmatprep.subr.mxu0 0.0
  %1612 = vmatpush1.msra.mxu0 0.0
  %1613 = vmatprep.subr.mxu0 0.0
  %1614 = vmatpush1.msra.mxu0 0.0
  %1615 = vmatprep.subr.mxu0 0.0
  %1616 = vmatpush1.msra.mxu0 0.0
  %1617 = vmatprep.subr.mxu0 0.0
  %1618 = vmatpush1.msra.mxu0 0.0
  %1619 = vmatprep.subr.mxu0 0.0
  %1620 = vmatpush1.msra.mxu0 0.0
  %1621 = vmatprep.subr.mxu0 0.0
  %1622 = vmatpush1.msra.mxu0 0.0
  %1623 = vmatprep.subr.mxu0 0.0
  %1624 = vmatpush1.msra.mxu0 0.0
  %1625 = vmatprep.mubr.f32.mxu0 0.0
  %1626 = vmatmul.mubr.f32.gmra.mrb[0].mxu0 %v1559
  %v1627 = vpop.f32.mrb[0].mxu0
  %v1628 = vadd.f32 %v1500, %v1627
  %v1629 = vpop.f32.mrb[0].mxu0
  %1630 = vdwg.mxu0
  %v1631 = vtanh.pop %v1628
  %v1632 = vld [vmem:[%s9] sm:$0xff]
  %v1633 = vld [vmem:[%s9 + $0x8] sm:$0xff]
  %v1634 = vld [vmem:[#allocation4] sm:$0x1]
  %v1636 = vlaneseq
  %v1637 = vshrl.u32 %v1636, 7
  %v1638 = vsub.s32 0, %v1637
  %v1639 = vrot.slane %v1634, %v1638
  %vm1641 = vcmask 130048
  %v1643 = vsel %vm1641, %v1631, 0
  %1645 = vmatprep.subr.mxu0 0.0
  %1646 = vmatpush1.msra.mxu0 %v1632
  %1647 = vmatprep.subr.mxu0 0.0
  %1648 = vmatpush1.msra.mxu0 %v1633
  %1649 = vmatprep.subr.mxu0 0.0
  %1650 = vmatpush1.msra.mxu0 0.0
  %1651 = vmatprep.subr.mxu0 0.0
  %1652 = vmatpush1.msra.mxu0 0.0
  %1653 = vmatprep.subr.mxu0 0.0
  %1654 = vmatpush1.msra.mxu0 0.0
  %1655 = vmatprep.subr.mxu0 0.0
  %1656 = vmatpush1.msra.mxu0 0.0
  %1657 = vmatprep.subr.mxu0 0.0
  %1658 = vmatpush1.msra.mxu0 0.0
  %1659 = vmatprep.subr.mxu0 0.0
  %1660 = vmatpush1.msra.mxu0 0.0
  %1661 = vmatprep.subr.mxu0 0.0
  %1662 = vmatpush1.msra.mxu0 0.0
  %1663 = vmatprep.subr.mxu0 0.0
  %1664 = vmatpush1.msra.mxu0 0.0
  %1665 = vmatprep.subr.mxu0 0.0
  %1666 = vmatpush1.msra.mxu0 0.0
  %1667 = vmatprep.subr.mxu0 0.0
  %1668 = vmatpush1.msra.mxu0 0.0
  %1669 = vmatprep.subr.mxu0 0.0
  %1670 = vmatpush1.msra.mxu0 0.0
  %1671 = vmatprep.subr.mxu0 0.0
  %1672 = vmatpush1.msra.mxu0 0.0
  %1673 = vmatprep.subr.mxu0 0.0
  %1674 = vmatpush1.msra.mxu0 0.0
  %1675 = vmatprep.subr.mxu0 0.0
  %1676 = vmatpush1.msra.mxu0 0.0
  %1677 = vmatprep.subr.mxu0 0.0
  %1678 = vmatpush1.msra.mxu0 0.0
  %1679 = vmatprep.subr.mxu0 0.0
  %1680 = vmatpush1.msra.mxu0 0.0
  %1681 = vmatprep.subr.mxu0 0.0
  %1682 = vmatpush1.msra.mxu0 0.0
  %1683 = vmatprep.subr.mxu0 0.0
  %1684 = vmatpush1.msra.mxu0 0.0
  %1685 = vmatprep.subr.mxu0 0.0
  %1686 = vmatpush1.msra.mxu0 0.0
  %1687 = vmatprep.subr.mxu0 0.0
  %1688 = vmatpush1.msra.mxu0 0.0
  %1689 = vmatprep.subr.mxu0 0.0
  %1690 = vmatpush1.msra.mxu0 0.0
  %1691 = vmatprep.subr.mxu0 0.0
  %1692 = vmatpush1.msra.mxu0 0.0
  %1693 = vmatprep.subr.mxu0 0.0
  %1694 = vmatpush1.msra.mxu0 0.0
  %1695 = vmatprep.subr.mxu0 0.0
  %1696 = vmatpush1.msra.mxu0 0.0
  %1697 = vmatprep.subr.mxu0 0.0
  %1698 = vmatpush1.msra.mxu0 0.0
  %1699 = vmatprep.subr.mxu0 0.0
  %1700 = vmatpush1.msra.mxu0 0.0
  %1701 = vmatprep.subr.mxu0 0.0
  %1702 = vmatpush1.msra.mxu0 0.0
  %1703 = vmatprep.subr.mxu0 0.0
  %1704 = vmatpush1.msra.mxu0 0.0
  %1705 = vmatprep.subr.mxu0 0.0
  %1706 = vmatpush1.msra.mxu0 0.0
  %1707 = vmatprep.subr.mxu0 0.0
  %1708 = vmatpush1.msra.mxu0 0.0
  %1709 = vmatprep.mubr.f32.mxu0 0.0
  %1710 = vmatmul.mubr.f32.gmra.mrb[0].mxu0 %v1643
  %v1711 = vpop.f32.mrb[0].mxu0
  %v1712 = vadd.f32 %v1639, %v1711
  %v1713 = vpop.f32.mrb[0].mxu0
  %1714 = vdwg.mxu0
  %vm1715 = vcmask 1024
  %1716 = vst.msk [vmem:[%s11] sm:$0x3] %vm1715, %v1712
  // Predicated region
  $region46: #{tpu_custom_call.1} parent=0 // pred_check
    _
  $region47: #{tpu_custom_call.1} parent=0 // pred_check_branch
    %1718 = sbr.rel (0) target = $region49
  $region48: #{tpu_custom_call.1} parent=0 // pred_region
    _
  $region49: #{tpu_custom_call.1} parent=0 // pred_fallthru
    _
  // Predicated region
  $region50: #{tpu_custom_call.1} parent=0 // pred_check
    _
  $region51: #{tpu_custom_call.1} parent=0 // pred_check_branch
    %1720 = sbr.rel (0) target = $region53
  $region52: #{tpu_custom_call.1} parent=0 // pred_region
    _
  $region53: #{tpu_custom_call.1} parent=0 // pred_fallthru
    _

</llo_original>
